<compile_context>
chip_gen: v6e
topology: v6e:2x2x1
jax: 0.10.0
libtpu: 0.0.40
codegen_flags: <defaults>
</compile_context>

<pallas_src>
import math

import jax
import jax.numpy as jnp
from jax import lax
from jax.experimental import pallas as pl
from jax.experimental.pallas import tpu as pltpu

# ---------------- scaled-down DINOv2 config (synthetic weights) ----------------
PATCH = 14
IN_CHANS = 3
EMBED_DIM = 32
NUM_HEADS = 2
HEAD_DIM = EMBED_DIM // NUM_HEADS
DEPTH = 4                      # the 4 blocks == the 4 returned intermediate layers
MLP_HIDDEN = 4 * EMBED_DIM
LN_EPS = 1e-6


# ------------------------------- kernel helpers --------------------------------
def _ln(x, g, b):
    mu = jnp.mean(x, axis=-1, keepdims=True)
    var = jnp.mean((x - mu) ** 2, axis=-1, keepdims=True)
    return (x - mu) * lax.rsqrt(var + LN_EPS) * g + b


# ------------------------------- the fused kernel -------------------------------
def _dinov2_kernel(
    patches_ref, clspos_ref, pw_ref, pb_ref,
    ln1g_ref, ln1b_ref, qkvw_ref, qkvb_ref, projw_ref, projb_ref, ls1_ref,
    ln2g_ref, ln2b_ref, fc1w_ref, fc1b_ref, fc2w_ref, fc2b_ref, ls2_ref,
    normg_ref, normb_ref,
    o_ref, tok_ref,
):
    D = EMBED_DIM
    d = pl.program_id(1)

    # ---- depth step 0: patch embedding + cls token + positional embedding -------
    @pl.when(d == 0)
    def _():
        emb = (jnp.dot(patches_ref[0], pw_ref[...],
                       preferred_element_type=jnp.float32) + pb_ref[...])      # (N, D)
        tok_ref[...] = (jnp.concatenate(
            [jnp.zeros((1, D), jnp.float32), emb], axis=0) + clspos_ref[...])  # (T, D)

    x = tok_ref[...]                                                           # (T, D)

    # ---- LayerNorm 1 + multi-head self-attention (batched over heads) -----------
    xn = _ln(x, ln1g_ref[0], ln1b_ref[0])
    qkv = (jnp.dot(xn, qkvw_ref[0], preferred_element_type=jnp.float32)
           + qkvb_ref[0])                                                      # (T, 3D)
    scale = 1.0 / math.sqrt(HEAD_DIM)

    def split(base):  # (T, 3D) lane slices -> (H, T, hd) head stack
        return jnp.stack(
            [qkv[:, base + h * HEAD_DIM: base + (h + 1) * HEAD_DIM]
             for h in range(NUM_HEADS)], axis=0)

    q, k, v = split(0), split(D), split(2 * D)
    s = lax.dot_general(q * scale, k, (((2,), (2,)), ((0,), (0,))),
                        preferred_element_type=jnp.float32)                    # (H, T, T)
    s = s - jnp.max(s, axis=-1, keepdims=True)
    p = jnp.exp(s)
    p = p * pl.reciprocal(jnp.sum(p, axis=-1, keepdims=True), approx=True)
    o = lax.dot_general(p, v, (((2,), (1,)), ((0,), (0,))),
                        preferred_element_type=jnp.float32)                    # (H, T, hd)
    attn = jnp.concatenate([o[h] for h in range(NUM_HEADS)], axis=-1)          # (T, D)
    attn = (jnp.dot(attn, projw_ref[0], preferred_element_type=jnp.float32)
            + projb_ref[0])
    x = x + ls1_ref[0] * attn                                                  # LayerScale 1

    # ---- LayerNorm 2 + MLP (exact GELU, PyTorch nn.GELU default) ----------------
    xn2 = _ln(x, ln2g_ref[0], ln2b_ref[0])
    h1 = jnp.dot(xn2, fc1w_ref[0], preferred_element_type=jnp.float32) + fc1b_ref[0]
    h1 = 0.5 * h1 * (1.0 + lax.erf(h1 * 0.7071067811865476))
    h2 = jnp.dot(h1, fc2w_ref[0], preferred_element_type=jnp.float32) + fc2b_ref[0]
    x = x + ls2_ref[0] * h2                                                    # LayerScale 2

    tok_ref[...] = x                                                           # carry residual

    # ---- fused final LayerNorm + drop cls + transpose -> lane-layer output ------
    y = _ln(x, normg_ref[...], normb_ref[...])                                 # (T, D)
    o_ref[0, 0] = jnp.transpose(y[1:, :])                                      # (D, N)


# ------------------------------- model definition -------------------------------
def init_params(key, num_patches):
    D, Hd, P = EMBED_DIM, MLP_HIDDEN, PATCH
    keys = iter(jax.random.split(key, 3 + 4 * DEPTH))
    nrm = lambda shape: 0.02 * jax.random.normal(next(keys), shape, jnp.float32)
    params = {
        "patch_w": nrm((IN_CHANS * P * P, D)),        # Conv2d(3, D, 14, 14) as matmul
        "patch_b": jnp.zeros((D,), jnp.float32),
        "cls_token": nrm((1, 1, D)),
        "pos_embed": nrm((1, 1 + num_patches, D)),
        "norm_g": jnp.ones((D,), jnp.float32),
        "norm_b": jnp.zeros((D,), jnp.float32),
        "blocks": [],
    }
    for _ in range(DEPTH):
        params["blocks"].append({
            "ln1_g": jnp.ones((D,), jnp.float32), "ln1_b": jnp.zeros((D,), jnp.float32),
            "qkv_w": nrm((D, 3 * D)), "qkv_b": jnp.zeros((3 * D,), jnp.float32),
            "proj_w": nrm((D, D)), "proj_b": jnp.zeros((D,), jnp.float32),
            "ls1": jnp.full((D,), 1e-5, jnp.float32),      # DINOv2 LayerScale init
            "ln2_g": jnp.ones((D,), jnp.float32), "ln2_b": jnp.zeros((D,), jnp.float32),
            "fc1_w": nrm((D, Hd)), "fc1_b": jnp.zeros((Hd,), jnp.float32),
            "fc2_w": nrm((Hd, D)), "fc2_b": jnp.zeros((D,), jnp.float32),
            "ls2": jnp.full((D,), 1e-5, jnp.float32),
        })
    return params


def dinov2_forward(x, params):
    """Equivalent of DINOv2.forward(inputs): list of 4 NCHW feature maps."""
    B, C, H, W = x.shape
    hp, wp = H // PATCH, W // PATCH
    N = hp * wp
    T = 1 + N
    D = EMBED_DIM
    CPP = C * PATCH * PATCH

    # Patch extraction (pure layout glue): Conv2d(3, D, k=14, s=14) becomes a matmul
    # over flattened 14x14 patches, done inside the kernel.
    patches = (x.reshape(B, C, hp, PATCH, wp, PATCH)
                 .transpose(0, 2, 4, 1, 3, 5)
                 .reshape(B, N, CPP))

    # Fold cls_token into the pos_embed row 0 so the kernel does a single add.
    # TODO(synk): pos-embed bicubic interpolation for mismatched resolutions is omitted
    # (pos_embed is built at exactly this grid size, so no interpolation is needed).
    cls_pos = params["pos_embed"][0].at[0].add(params["cls_token"][0, 0])      # (T, D)

    stackm = lambda n: jnp.stack([blk[n] for blk in params["blocks"]], axis=0)
    stackv = lambda n: jnp.stack([blk[n] for blk in params["blocks"]],
                                 axis=0).reshape(DEPTH, 1, -1)

    args = (patches, cls_pos,
            params["patch_w"], params["patch_b"].reshape(1, D),
            stackv("ln1_g"), stackv("ln1_b"),
            stackm("qkv_w"), stackv("qkv_b"),
            stackm("proj_w"), stackv("proj_b"), stackv("ls1"),
            stackv("ln2_g"), stackv("ln2_b"),
            stackm("fc1_w"), stackv("fc1_b"),
            stackm("fc2_w"), stackv("fc2_b"), stackv("ls2"),
            params["norm_g"].reshape(1, D), params["norm_b"].reshape(1, D))

    def const(shape):   # constant block, fetched once
        return pl.BlockSpec(shape, lambda b, d, _n=len(shape): (0,) * _n)

    def perd(shape):    # per-depth stacked weights, pipelined along the depth axis
        return pl.BlockSpec((1,) + shape,
                            lambda b, d, _n=len(shape): (d,) + (0,) * _n)

    in_specs = [
        pl.BlockSpec((1, N, CPP), lambda b, d: (b, 0, 0)),    # patches (per image)
        const((T, D)),                                        # cls+pos bias
        const((CPP, D)), const((1, D)),                       # patch embed weights
        perd((1, D)), perd((1, D)),                           # ln1 g/b
        perd((D, 3 * D)), perd((1, 3 * D)),                   # qkv w/b
        perd((D, D)), perd((1, D)), perd((1, D)),             # proj w/b, ls1
        perd((1, D)), perd((1, D)),                           # ln2 g/b
        perd((D, MLP_HIDDEN)), perd((1, MLP_HIDDEN)),         # fc1 w/b
        perd((MLP_HIDDEN, D)), perd((1, D)), perd((1, D)),    # fc2 w/b, ls2
        const((1, D)), const((1, D)),                         # final norm g/b
    ]

    out = pl.pallas_call(
        _dinov2_kernel,
        out_shape=jax.ShapeDtypeStruct((DEPTH, B, D, N), jnp.float32),
        grid=(B, DEPTH),
        in_specs=in_specs,
        out_specs=pl.BlockSpec((1, 1, D, N), lambda b, d: (d, b, 0, 0)),
        scratch_shapes=[pltpu.VMEM((T, D), jnp.float32)],
        compiler_params=pltpu.CompilerParams(
            dimension_semantics=("parallel", "arbitrary")),
    )(*args)

    # Kernel already emitted (D, N) per layer; only a free reshape remains.
    return [out[i].reshape(B, D, hp, wp) for i in range(DEPTH)]


if __name__ == "__main__":
    key = jax.random.PRNGKey(0)
    pkey, xkey = jax.random.split(key)

    B, H, W = 2, 56, 56                       # 4x4 = 16 patches per image
    params = init_params(pkey, num_patches=(H // PATCH) * (W // PATCH))
    x = jax.random.normal(xkey, (B, IN_CHANS, H, W), jnp.float32)

    outs = dinov2_forward(x, params)
    outs = jax.block_until_ready(outs)

    assert len(outs) == 4
    for o in outs:
        assert o.shape == (B, EMBED_DIM, H // PATCH, W // PATCH)
        assert o.dtype == jnp.float32
        assert bool(jnp.all(jnp.isfinite(o)))
    print("KERNEL_OK")
</pallas_src>

<mosaic_0001>
module attributes {stable_mosaic.version = 11 : i64} {
  func.func @_dinov2_kernel(%arg0: i32, %arg1: i32, %arg2: memref<1x16x588xf32, #tpu.memory_space<vmem>>, %arg3: memref<17x32xf32, #tpu.memory_space<vmem>>, %arg4: memref<588x32xf32, #tpu.memory_space<vmem>>, %arg5: memref<1x32xf32, #tpu.memory_space<vmem>>, %arg6: memref<1x1x32xf32, #tpu.memory_space<vmem>>, %arg7: memref<1x1x32xf32, #tpu.memory_space<vmem>>, %arg8: memref<1x32x96xf32, #tpu.memory_space<vmem>>, %arg9: memref<1x1x96xf32, #tpu.memory_space<vmem>>, %arg10: memref<1x32x32xf32, #tpu.memory_space<vmem>>, %arg11: memref<1x1x32xf32, #tpu.memory_space<vmem>>, %arg12: memref<1x1x32xf32, #tpu.memory_space<vmem>>, %arg13: memref<1x1x32xf32, #tpu.memory_space<vmem>>, %arg14: memref<1x1x32xf32, #tpu.memory_space<vmem>>, %arg15: memref<1x32x128xf32, #tpu.memory_space<vmem>>, %arg16: memref<1x1x128xf32, #tpu.memory_space<vmem>>, %arg17: memref<1x128x32xf32, #tpu.memory_space<vmem>>, %arg18: memref<1x1x32xf32, #tpu.memory_space<vmem>>, %arg19: memref<1x1x32xf32, #tpu.memory_space<vmem>>, %arg20: memref<1x32xf32, #tpu.memory_space<vmem>>, %arg21: memref<1x32xf32, #tpu.memory_space<vmem>>, %arg22: memref<1x1x32x16xf32, #tpu.memory_space<vmem>>, %arg23: memref<17x32xf32, #tpu.memory_space<vmem>>) attributes {dimension_semantics = [#tpu.dimension_semantics<parallel>, #tpu.dimension_semantics<arbitrary>], iteration_bounds = array<i64: 2, 4>, scalar_prefetch = 0 : i64, scratch_operands = 1 : i64, tpu.core_type = #tpu.core_type<tc>, window_params = [{transform_indices = @transform_0, window_bounds = array<i64: 1, 16, 588>}, {pipeline_mode = #tpu.pipeline_mode<synchronous>, transform_indices = @transform_1, window_bounds = array<i64: 17, 32>}, {pipeline_mode = #tpu.pipeline_mode<synchronous>, transform_indices = @transform_2, window_bounds = array<i64: 588, 32>}, {pipeline_mode = #tpu.pipeline_mode<synchronous>, transform_indices = @transform_3, window_bounds = array<i64: 1, 32>}, {transform_indices = @transform_4, window_bounds = array<i64: 1, 1, 32>}, {transform_indices = @transform_5, window_bounds = array<i64: 1, 1, 32>}, {transform_indices = @transform_6, window_bounds = array<i64: 1, 32, 96>}, {transform_indices = @transform_7, window_bounds = array<i64: 1, 1, 96>}, {transform_indices = @transform_8, window_bounds = array<i64: 1, 32, 32>}, {transform_indices = @transform_9, window_bounds = array<i64: 1, 1, 32>}, {transform_indices = @transform_10, window_bounds = array<i64: 1, 1, 32>}, {transform_indices = @transform_11, window_bounds = array<i64: 1, 1, 32>}, {transform_indices = @transform_12, window_bounds = array<i64: 1, 1, 32>}, {transform_indices = @transform_13, window_bounds = array<i64: 1, 32, 128>}, {transform_indices = @transform_14, window_bounds = array<i64: 1, 1, 128>}, {transform_indices = @transform_15, window_bounds = array<i64: 1, 128, 32>}, {transform_indices = @transform_16, window_bounds = array<i64: 1, 1, 32>}, {transform_indices = @transform_17, window_bounds = array<i64: 1, 1, 32>}, {pipeline_mode = #tpu.pipeline_mode<synchronous>, transform_indices = @transform_18, window_bounds = array<i64: 1, 32>}, {pipeline_mode = #tpu.pipeline_mode<synchronous>, transform_indices = @transform_19, window_bounds = array<i64: 1, 32>}, {transform_indices = @transform_20, window_bounds = array<i64: 1, 1, 32, 16>}]} {
    %c0_i32 = arith.constant 0 : i32
    %0 = arith.cmpi eq, %arg1, %c0_i32 : i32
    %1 = arith.extui %0 : i1 to i32
    %c0_i32_0 = arith.constant 0 : i32
    %2 = arith.cmpi ne, %1, %c0_i32_0 : i32
    scf.if %2 {
      %c0_80 = arith.constant 0 : index
      %c0_81 = arith.constant 0 : index
      %c0_82 = arith.constant 0 : index
      %166 = vector.load %arg2[%c0_80, %c0_81, %c0_82] : memref<1x16x588xf32, #tpu.memory_space<vmem>>, vector<1x16x588xf32>
      %167 = vector.shape_cast %166 : vector<1x16x588xf32> to vector<16x588xf32>
      %c0_83 = arith.constant 0 : index
      %c0_84 = arith.constant 0 : index
      %168 = vector.load %arg4[%c0_83, %c0_84] : memref<588x32xf32, #tpu.memory_space<vmem>>, vector<588x32xf32>
      %cst_85 = arith.constant dense<0.000000e+00> : vector<16x32xf32>
      %169 = tpu.matmul %167, %168, %cst_85 {dimension_numbers = #tpu.dot_dimension_numbers<[1], [0], [0], [1], [0, 0, 1, 1], [], []>} : vector<16x588xf32>, vector<588x32xf32>, vector<16x32xf32> -> vector<16x32xf32>
      %c0_86 = arith.constant 0 : index
      %c0_87 = arith.constant 0 : index
      %170 = vector.load %arg5[%c0_86, %c0_87] : memref<1x32xf32, #tpu.memory_space<vmem>>, vector<1x32xf32>
      %171 = vector.broadcast %170 : vector<1x32xf32> to vector<16x32xf32>
      %172 = arith.addf %169, %171 : vector<16x32xf32>
      %cst_88 = arith.constant 0.000000e+00 : f32
      %173 = vector.broadcast %cst_88 : f32 to vector<1x32xf32>
      %174 = tpu.concatenate %173, %172 in 0 : vector<1x32xf32>, vector<16x32xf32> -> vector<17x32xf32>
      %c0_89 = arith.constant 0 : index
      %c0_90 = arith.constant 0 : index
      %175 = vector.load %arg3[%c0_89, %c0_90] : memref<17x32xf32, #tpu.memory_space<vmem>>, vector<17x32xf32>
      %176 = arith.addf %174, %175 : vector<17x32xf32>
      %c0_91 = arith.constant 0 : index
      %c0_92 = arith.constant 0 : index
      %177 = vector.load %arg23[%c0_91, %c0_92] : memref<17x32xf32, #tpu.memory_space<vmem>>, vector<17x32xf32>
      tpu.vector_store %arg23[%c0_91, %c0_92], %176 {strides = array<i32>} : memref<17x32xf32, #tpu.memory_space<vmem>>, vector<17x32xf32>,
    } else {
    }
    %c0 = arith.constant 0 : index
    %c0_1 = arith.constant 0 : index
    %3 = vector.load %arg23[%c0, %c0_1] : memref<17x32xf32, #tpu.memory_space<vmem>>, vector<17x32xf32>
    %c0_2 = arith.constant 0 : index
    %c0_3 = arith.constant 0 : index
    %c0_4 = arith.constant 0 : index
    %4 = vector.load %arg6[%c0_2, %c0_3, %c0_4] : memref<1x1x32xf32, #tpu.memory_space<vmem>>, vector<1x1x32xf32>
    %5 = vector.shape_cast %4 : vector<1x1x32xf32> to vector<1x32xf32>
    %c0_5 = arith.constant 0 : index
    %c0_6 = arith.constant 0 : index
    %c0_7 = arith.constant 0 : index
    %6 = vector.load %arg7[%c0_5, %c0_6, %c0_7] : memref<1x1x32xf32, #tpu.memory_space<vmem>>, vector<1x1x32xf32>
    %7 = vector.shape_cast %6 : vector<1x1x32xf32> to vector<1x32xf32>
    %cst = arith.constant dense<0.000000e+00> : vector<17xf32>
    %8 = vector.multi_reduction <add>, %3, %cst [1] : vector<17x32xf32> to vector<17xf32>
    %9 = vector.shape_cast %8 : vector<17xf32> to vector<17x1xf32>
    %cst_8 = arith.constant 3.200000e+01 : f32
    %10 = vector.broadcast %cst_8 : f32 to vector<17x1xf32>
    %11 = arith.divf %9, %10 : vector<17x1xf32>
    %12 = vector.broadcast %11 : vector<17x1xf32> to vector<17x32xf32>
    %13 = arith.subf %3, %12 : vector<17x32xf32>
    %14 = arith.mulf %13, %13 : vector<17x32xf32>
    %cst_9 = arith.constant dense<0.000000e+00> : vector<17xf32>
    %15 = vector.multi_reduction <add>, %14, %cst_9 [1] : vector<17x32xf32> to vector<17xf32>
    %16 = vector.shape_cast %15 : vector<17xf32> to vector<17x1xf32>
    %cst_10 = arith.constant 3.200000e+01 : f32
    %17 = vector.broadcast %cst_10 : f32 to vector<17x1xf32>
    %18 = arith.divf %16, %17 : vector<17x1xf32>
    %19 = vector.broadcast %11 : vector<17x1xf32> to vector<17x32xf32>
    %20 = arith.subf %3, %19 : vector<17x32xf32>
    %cst_11 = arith.constant 9.99999997E-7 : f32
    %21 = vector.broadcast %cst_11 : f32 to vector<17x1xf32>
    %22 = arith.addf %18, %21 : vector<17x1xf32>
    %23 = math.rsqrt %22 : vector<17x1xf32>
    %24 = vector.broadcast %23 : vector<17x1xf32> to vector<17x32xf32>
    %25 = arith.mulf %20, %24 : vector<17x32xf32>
    %26 = vector.broadcast %5 : vector<1x32xf32> to vector<17x32xf32>
    %27 = arith.mulf %25, %26 : vector<17x32xf32>
    %28 = vector.broadcast %7 : vector<1x32xf32> to vector<17x32xf32>
    %29 = arith.addf %27, %28 : vector<17x32xf32>
    %c0_12 = arith.constant 0 : index
    %c0_13 = arith.constant 0 : index
    %c0_14 = arith.constant 0 : index
    %30 = vector.load %arg8[%c0_12, %c0_13, %c0_14] : memref<1x32x96xf32, #tpu.memory_space<vmem>>, vector<1x32x96xf32>
    %31 = vector.shape_cast %30 : vector<1x32x96xf32> to vector<32x96xf32>
    %cst_15 = arith.constant dense<0.000000e+00> : vector<17x96xf32>
    %32 = tpu.matmul %29, %31, %cst_15 {dimension_numbers = #tpu.dot_dimension_numbers<[1], [0], [0], [1], [0, 0, 1, 1], [], []>} : vector<17x32xf32>, vector<32x96xf32>, vector<17x96xf32> -> vector<17x96xf32>
    %c0_16 = arith.constant 0 : index
    %c0_17 = arith.constant 0 : index
    %c0_18 = arith.constant 0 : index
    %33 = vector.load %arg9[%c0_16, %c0_17, %c0_18] : memref<1x1x96xf32, #tpu.memory_space<vmem>>, vector<1x1x96xf32>
    %34 = vector.shape_cast %33 : vector<1x1x96xf32> to vector<1x96xf32>
    %35 = vector.broadcast %34 : vector<1x96xf32> to vector<17x96xf32>
    %36 = arith.addf %32, %35 : vector<17x96xf32>
    %37 = vector.extract_strided_slice %36 {offsets = [0, 0], sizes = [17, 16], strides = [1, 1]} : vector<17x96xf32> to vector<17x16xf32>
    %38 = vector.extract_strided_slice %36 {offsets = [0, 16], sizes = [17, 16], strides = [1, 1]} : vector<17x96xf32> to vector<17x16xf32>
    %39 = vector.shape_cast %37 : vector<17x16xf32> to vector<1x17x16xf32>
    %40 = vector.shape_cast %38 : vector<17x16xf32> to vector<1x17x16xf32>
    %41 = tpu.concatenate %39, %40 in 0 : vector<1x17x16xf32>, vector<1x17x16xf32> -> vector<2x17x16xf32>
    %42 = vector.extract_strided_slice %36 {offsets = [0, 32], sizes = [17, 16], strides = [1, 1]} : vector<17x96xf32> to vector<17x16xf32>
    %43 = vector.extract_strided_slice %36 {offsets = [0, 48], sizes = [17, 16], strides = [1, 1]} : vector<17x96xf32> to vector<17x16xf32>
    %44 = vector.shape_cast %42 : vector<17x16xf32> to vector<1x17x16xf32>
    %45 = vector.shape_cast %43 : vector<17x16xf32> to vector<1x17x16xf32>
    %46 = tpu.concatenate %44, %45 in 0 : vector<1x17x16xf32>, vector<1x17x16xf32> -> vector<2x17x16xf32>
    %47 = vector.extract_strided_slice %36 {offsets = [0, 64], sizes = [17, 16], strides = [1, 1]} : vector<17x96xf32> to vector<17x16xf32>
    %48 = vector.extract_strided_slice %36 {offsets = [0, 80], sizes = [17, 16], strides = [1, 1]} : vector<17x96xf32> to vector<17x16xf32>
    %49 = vector.shape_cast %47 : vector<17x16xf32> to vector<1x17x16xf32>
    %50 = vector.shape_cast %48 : vector<17x16xf32> to vector<1x17x16xf32>
    %51 = tpu.concatenate %49, %50 in 0 : vector<1x17x16xf32>, vector<1x17x16xf32> -> vector<2x17x16xf32>
    %cst_19 = arith.constant 2.500000e-01 : f32
    %52 = vector.broadcast %cst_19 : f32 to vector<2x17x16xf32>
    %53 = arith.mulf %41, %52 : vector<2x17x16xf32>
    %cst_20 = arith.constant dense<0.000000e+00> : vector<2x17x17xf32>
    %54 = tpu.matmul %53, %46, %cst_20 {dimension_numbers = #tpu.dot_dimension_numbers<[2], [2], [1], [1], [0, 0, 0, 1, 1, 1], [0], [0]>} : vector<2x17x16xf32>, vector<2x17x16xf32>, vector<2x17x17xf32> -> vector<2x17x17xf32>
    %cst_21 = arith.constant dense<0xFF800000> : vector<2x17xf32>
    %55 = vector.multi_reduction <maximumf>, %54, %cst_21 [2] : vector<2x17x17xf32> to vector<2x17xf32>
    %56 = vector.shape_cast %55 : vector<2x17xf32> to vector<2x17x1xf32>
    %57 = vector.broadcast %56 : vector<2x17x1xf32> to vector<2x17x17xf32>
    %58 = arith.subf %54, %57 : vector<2x17x17xf32>
    %59 = math.exp %58 : vector<2x17x17xf32>
    %cst_22 = arith.constant dense<0.000000e+00> : vector<2x17xf32>
    %60 = vector.multi_reduction <add>, %59, %cst_22 [2] : vector<2x17x17xf32> to vector<2x17xf32>
    %61 = vector.shape_cast %60 : vector<2x17xf32> to vector<2x17x1xf32>
    %62 = tpu.reciprocal %61 {approx = true} : vector<2x17x1xf32> -> vector<2x17x1xf32>
    %63 = vector.broadcast %62 : vector<2x17x1xf32> to vector<2x17x17xf32>
    %64 = arith.mulf %59, %63 : vector<2x17x17xf32>
    %cst_23 = arith.constant dense<0.000000e+00> : vector<2x17x16xf32>
    %65 = tpu.matmul %64, %51, %cst_23 {dimension_numbers = #tpu.dot_dimension_numbers<[2], [1], [1], [2], [0, 0, 0, 1, 1, 2], [0], [0]>} : vector<2x17x17xf32>, vector<2x17x16xf32>, vector<2x17x16xf32> -> vector<2x17x16xf32>
    %66 = vector.extract_strided_slice %65 {offsets = [0, 0, 0], sizes = [1, 17, 16], strides = [1, 1, 1]} : vector<2x17x16xf32> to vector<1x17x16xf32>
    %67 = vector.shape_cast %66 : vector<1x17x16xf32> to vector<17x16xf32>
    %68 = vector.extract_strided_slice %65 {offsets = [1, 0, 0], sizes = [1, 17, 16], strides = [1, 1, 1]} : vector<2x17x16xf32> to vector<1x17x16xf32>
    %69 = vector.shape_cast %68 : vector<1x17x16xf32> to vector<17x16xf32>
    %70 = tpu.concatenate %67, %69 in 1 : vector<17x16xf32>, vector<17x16xf32> -> vector<17x32xf32>
    %c0_24 = arith.constant 0 : index
    %c0_25 = arith.constant 0 : index
    %c0_26 = arith.constant 0 : index
    %71 = vector.load %arg10[%c0_24, %c0_25, %c0_26] : memref<1x32x32xf32, #tpu.memory_space<vmem>>, vector<1x32x32xf32>
    %72 = vector.shape_cast %71 : vector<1x32x32xf32> to vector<32x32xf32>
    %cst_27 = arith.constant dense<0.000000e+00> : vector<17x32xf32>
    %73 = tpu.matmul %70, %72, %cst_27 {dimension_numbers = #tpu.dot_dimension_numbers<[1], [0], [0], [1], [0, 0, 1, 1], [], []>} : vector<17x32xf32>, vector<32x32xf32>, vector<17x32xf32> -> vector<17x32xf32>
    %c0_28 = arith.constant 0 : index
    %c0_29 = arith.constant 0 : index
    %c0_30 = arith.constant 0 : index
    %74 = vector.load %arg11[%c0_28, %c0_29, %c0_30] : memref<1x1x32xf32, #tpu.memory_space<vmem>>, vector<1x1x32xf32>
    %75 = vector.shape_cast %74 : vector<1x1x32xf32> to vector<1x32xf32>
    %76 = vector.broadcast %75 : vector<1x32xf32> to vector<17x32xf32>
    %77 = arith.addf %73, %76 : vector<17x32xf32>
    %c0_31 = arith.constant 0 : index
    %c0_32 = arith.constant 0 : index
    %c0_33 = arith.constant 0 : index
    %78 = vector.load %arg12[%c0_31, %c0_32, %c0_33] : memref<1x1x32xf32, #tpu.memory_space<vmem>>, vector<1x1x32xf32>
    %79 = vector.shape_cast %78 : vector<1x1x32xf32> to vector<1x32xf32>
    %80 = vector.broadcast %79 : vector<1x32xf32> to vector<17x32xf32>
    %81 = arith.mulf %80, %77 : vector<17x32xf32>
    %82 = arith.addf %3, %81 : vector<17x32xf32>
    %c0_34 = arith.constant 0 : index
    %c0_35 = arith.constant 0 : index
    %c0_36 = arith.constant 0 : index
    %83 = vector.load %arg13[%c0_34, %c0_35, %c0_36] : memref<1x1x32xf32, #tpu.memory_space<vmem>>, vector<1x1x32xf32>
    %84 = vector.shape_cast %83 : vector<1x1x32xf32> to vector<1x32xf32>
    %c0_37 = arith.constant 0 : index
    %c0_38 = arith.constant 0 : index
    %c0_39 = arith.constant 0 : index
    %85 = vector.load %arg14[%c0_37, %c0_38, %c0_39] : memref<1x1x32xf32, #tpu.memory_space<vmem>>, vector<1x1x32xf32>
    %86 = vector.shape_cast %85 : vector<1x1x32xf32> to vector<1x32xf32>
    %cst_40 = arith.constant dense<0.000000e+00> : vector<17xf32>
    %87 = vector.multi_reduction <add>, %82, %cst_40 [1] : vector<17x32xf32> to vector<17xf32>
    %88 = vector.shape_cast %87 : vector<17xf32> to vector<17x1xf32>
    %cst_41 = arith.constant 3.200000e+01 : f32
    %89 = vector.broadcast %cst_41 : f32 to vector<17x1xf32>
    %90 = arith.divf %88, %89 : vector<17x1xf32>
    %91 = vector.broadcast %90 : vector<17x1xf32> to vector<17x32xf32>
    %92 = arith.subf %82, %91 : vector<17x32xf32>
    %93 = arith.mulf %92, %92 : vector<17x32xf32>
    %cst_42 = arith.constant dense<0.000000e+00> : vector<17xf32>
    %94 = vector.multi_reduction <add>, %93, %cst_42 [1] : vector<17x32xf32> to vector<17xf32>
    %95 = vector.shape_cast %94 : vector<17xf32> to vector<17x1xf32>
    %cst_43 = arith.constant 3.200000e+01 : f32
    %96 = vector.broadcast %cst_43 : f32 to vector<17x1xf32>
    %97 = arith.divf %95, %96 : vector<17x1xf32>
    %98 = vector.broadcast %90 : vector<17x1xf32> to vector<17x32xf32>
    %99 = arith.subf %82, %98 : vector<17x32xf32>
    %cst_44 = arith.constant 9.99999997E-7 : f32
    %100 = vector.broadcast %cst_44 : f32 to vector<17x1xf32>
    %101 = arith.addf %97, %100 : vector<17x1xf32>
    %102 = math.rsqrt %101 : vector<17x1xf32>
    %103 = vector.broadcast %102 : vector<17x1xf32> to vector<17x32xf32>
    %104 = arith.mulf %99, %103 : vector<17x32xf32>
    %105 = vector.broadcast %84 : vector<1x32xf32> to vector<17x32xf32>
    %106 = arith.mulf %104, %105 : vector<17x32xf32>
    %107 = vector.broadcast %86 : vector<1x32xf32> to vector<17x32xf32>
    %108 = arith.addf %106, %107 : vector<17x32xf32>
    %c0_45 = arith.constant 0 : index
    %c0_46 = arith.constant 0 : index
    %c0_47 = arith.constant 0 : index
    %109 = vector.load %arg15[%c0_45, %c0_46, %c0_47] : memref<1x32x128xf32, #tpu.memory_space<vmem>>, vector<1x32x128xf32>
    %110 = vector.shape_cast %109 : vector<1x32x128xf32> to vector<32x128xf32>
    %cst_48 = arith.constant dense<0.000000e+00> : vector<17x128xf32>
    %111 = tpu.matmul %108, %110, %cst_48 {dimension_numbers = #tpu.dot_dimension_numbers<[1], [0], [0], [1], [0, 0, 1, 1], [], []>} : vector<17x32xf32>, vector<32x128xf32>, vector<17x128xf32> -> vector<17x128xf32>
    %c0_49 = arith.constant 0 : index
    %c0_50 = arith.constant 0 : index
    %c0_51 = arith.constant 0 : index
    %112 = vector.load %arg16[%c0_49, %c0_50, %c0_51] : memref<1x1x128xf32, #tpu.memory_space<vmem>>, vector<1x1x128xf32>
    %113 = vector.shape_cast %112 : vector<1x1x128xf32> to vector<1x128xf32>
    %114 = vector.broadcast %113 : vector<1x128xf32> to vector<17x128xf32>
    %115 = arith.addf %111, %114 : vector<17x128xf32>
    %cst_52 = arith.constant 5.000000e-01 : f32
    %116 = vector.broadcast %cst_52 : f32 to vector<17x128xf32>
    %117 = arith.mulf %116, %115 : vector<17x128xf32>
    %cst_53 = arith.constant 0.707106769 : f32
    %118 = vector.broadcast %cst_53 : f32 to vector<17x128xf32>
    %119 = arith.mulf %115, %118 : vector<17x128xf32>
    %120 = math.erf %119 : vector<17x128xf32>
    %cst_54 = arith.constant 1.000000e+00 : f32
    %121 = vector.broadcast %cst_54 : f32 to vector<17x128xf32>
    %122 = arith.addf %121, %120 : vector<17x128xf32>
    %123 = arith.mulf %117, %122 : vector<17x128xf32>
    %c0_55 = arith.constant 0 : index
    %c0_56 = arith.constant 0 : index
    %c0_57 = arith.constant 0 : index
    %124 = vector.load %arg17[%c0_55, %c0_56, %c0_57] : memref<1x128x32xf32, #tpu.memory_space<vmem>>, vector<1x128x32xf32>
    %125 = vector.shape_cast %124 : vector<1x128x32xf32> to vector<128x32xf32>
    %cst_58 = arith.constant dense<0.000000e+00> : vector<17x32xf32>
    %126 = tpu.matmul %123, %125, %cst_58 {dimension_numbers = #tpu.dot_dimension_numbers<[1], [0], [0], [1], [0, 0, 1, 1], [], []>} : vector<17x128xf32>, vector<128x32xf32>, vector<17x32xf32> -> vector<17x32xf32>
    %c0_59 = arith.constant 0 : index
    %c0_60 = arith.constant 0 : index
    %c0_61 = arith.constant 0 : index
    %127 = vector.load %arg18[%c0_59, %c0_60, %c0_61] : memref<1x1x32xf32, #tpu.memory_space<vmem>>, vector<1x1x32xf32>
    %128 = vector.shape_cast %127 : vector<1x1x32xf32> to vector<1x32xf32>
    %129 = vector.broadcast %128 : vector<1x32xf32> to vector<17x32xf32>
    %130 = arith.addf %126, %129 : vector<17x32xf32>
    %c0_62 = arith.constant 0 : index
    %c0_63 = arith.constant 0 : index
    %c0_64 = arith.constant 0 : index
    %131 = vector.load %arg19[%c0_62, %c0_63, %c0_64] : memref<1x1x32xf32, #tpu.memory_space<vmem>>, vector<1x1x32xf32>
    %132 = vector.shape_cast %131 : vector<1x1x32xf32> to vector<1x32xf32>
    %133 = vector.broadcast %132 : vector<1x32xf32> to vector<17x32xf32>
    %134 = arith.mulf %133, %130 : vector<17x32xf32>
    %135 = arith.addf %82, %134 : vector<17x32xf32>
    %c0_65 = arith.constant 0 : index
    %c0_66 = arith.constant 0 : index
    %136 = vector.load %arg23[%c0_65, %c0_66] : memref<17x32xf32, #tpu.memory_space<vmem>>, vector<17x32xf32>
    tpu.vector_store %arg23[%c0_65, %c0_66], %135 {strides = array<i32>} : memref<17x32xf32, #tpu.memory_space<vmem>>, vector<17x32xf32>,
    %c0_67 = arith.constant 0 : index
    %c0_68 = arith.constant 0 : index
    %137 = vector.load %arg20[%c0_67, %c0_68] : memref<1x32xf32, #tpu.memory_space<vmem>>, vector<1x32xf32>
    %c0_69 = arith.constant 0 : index
    %c0_70 = arith.constant 0 : index
    %138 = vector.load %arg21[%c0_69, %c0_70] : memref<1x32xf32, #tpu.memory_space<vmem>>, vector<1x32xf32>
    %cst_71 = arith.constant dense<0.000000e+00> : vector<17xf32>
    %139 = vector.multi_reduction <add>, %135, %cst_71 [1] : vector<17x32xf32> to vector<17xf32>
    %140 = vector.shape_cast %139 : vector<17xf32> to vector<17x1xf32>
    %cst_72 = arith.constant 3.200000e+01 : f32
    %141 = vector.broadcast %cst_72 : f32 to vector<17x1xf32>
    %142 = arith.divf %140, %141 : vector<17x1xf32>
    %143 = vector.broadcast %142 : vector<17x1xf32> to vector<17x32xf32>
    %144 = arith.subf %135, %143 : vector<17x32xf32>
    %145 = arith.mulf %144, %144 : vector<17x32xf32>
    %cst_73 = arith.constant dense<0.000000e+00> : vector<17xf32>
    %146 = vector.multi_reduction <add>, %145, %cst_73 [1] : vector<17x32xf32> to vector<17xf32>
    %147 = vector.shape_cast %146 : vector<17xf32> to vector<17x1xf32>
    %cst_74 = arith.constant 3.200000e+01 : f32
    %148 = vector.broadcast %cst_74 : f32 to vector<17x1xf32>
    %149 = arith.divf %147, %148 : vector<17x1xf32>
    %150 = vector.broadcast %142 : vector<17x1xf32> to vector<17x32xf32>
    %151 = arith.subf %135, %150 : vector<17x32xf32>
    %cst_75 = arith.constant 9.99999997E-7 : f32
    %152 = vector.broadcast %cst_75 : f32 to vector<17x1xf32>
    %153 = arith.addf %149, %152 : vector<17x1xf32>
    %154 = math.rsqrt %153 : vector<17x1xf32>
    %155 = vector.broadcast %154 : vector<17x1xf32> to vector<17x32xf32>
    %156 = arith.mulf %151, %155 : vector<17x32xf32>
    %157 = vector.broadcast %137 : vector<1x32xf32> to vector<17x32xf32>
    %158 = arith.mulf %156, %157 : vector<17x32xf32>
    %159 = vector.broadcast %138 : vector<1x32xf32> to vector<17x32xf32>
    %160 = arith.addf %158, %159 : vector<17x32xf32>
    %161 = vector.extract_strided_slice %160 {offsets = [1, 0], sizes = [16, 32], strides = [1, 1]} : vector<17x32xf32> to vector<16x32xf32>
    %162 = tpu.transpose %161, [1, 0] : vector<16x32xf32> -> vector<32x16xf32>
    %c0_76 = arith.constant 0 : index
    %c0_77 = arith.constant 0 : index
    %c0_78 = arith.constant 0 : index
    %c0_79 = arith.constant 0 : index
    %163 = vector.load %arg22[%c0_76, %c0_77, %c0_78, %c0_79] : memref<1x1x32x16xf32, #tpu.memory_space<vmem>>, vector<1x1x32x16xf32>
    %164 = vector.shape_cast %163 : vector<1x1x32x16xf32> to vector<32x16xf32>
    %165 = vector.shape_cast %162 : vector<32x16xf32> to vector<1x1x32x16xf32>
    tpu.vector_store %arg22[%c0_76, %c0_77, %c0_78, %c0_79], %165 {strides = array<i32>} : memref<1x1x32x16xf32, #tpu.memory_space<vmem>>, vector<1x1x32x16xf32>,
    return
  }
  func.func @transform_0(%arg0: i32, %arg1: i32) -> (i32, i32, i32) {
    %c0_i32 = arith.constant 0 : i32
    %c0_i32_0 = arith.constant 0 : i32
    %c0_i32_1 = arith.constant 0 : i32
    return %arg0, %c0_i32, %c0_i32_0 : i32, i32, i32
  }
  func.func @transform_1(%arg0: i32, %arg1: i32) -> (i32, i32) {
    %c0_i32 = arith.constant 0 : i32
    %c0_i32_0 = arith.constant 0 : i32
    %c0_i32_1 = arith.constant 0 : i32
    return %c0_i32, %c0_i32_0 : i32, i32
  }
  func.func @transform_2(%arg0: i32, %arg1: i32) -> (i32, i32) {
    %c0_i32 = arith.constant 0 : i32
    %c0_i32_0 = arith.constant 0 : i32
    %c0_i32_1 = arith.constant 0 : i32
    return %c0_i32, %c0_i32_0 : i32, i32
  }
  func.func @transform_3(%arg0: i32, %arg1: i32) -> (i32, i32) {
    %c0_i32 = arith.constant 0 : i32
    %c0_i32_0 = arith.constant 0 : i32
    %c0_i32_1 = arith.constant 0 : i32
    return %c0_i32, %c0_i32_0 : i32, i32
  }
  func.func @transform_4(%arg0: i32, %arg1: i32) -> (i32, i32, i32) {
    %c0_i32 = arith.constant 0 : i32
    %c0_i32_0 = arith.constant 0 : i32
    %c0_i32_1 = arith.constant 0 : i32
    return %arg1, %c0_i32, %c0_i32_0 : i32, i32, i32
  }
  func.func @transform_5(%arg0: i32, %arg1: i32) -> (i32, i32, i32) {
    %c0_i32 = arith.constant 0 : i32
    %c0_i32_0 = arith.constant 0 : i32
    %c0_i32_1 = arith.constant 0 : i32
    return %arg1, %c0_i32, %c0_i32_0 : i32, i32, i32
  }
  func.func @transform_6(%arg0: i32, %arg1: i32) -> (i32, i32, i32) {
    %c0_i32 = arith.constant 0 : i32
    %c0_i32_0 = arith.constant 0 : i32
    %c0_i32_1 = arith.constant 0 : i32
    return %arg1, %c0_i32, %c0_i32_0 : i32, i32, i32
  }
  func.func @transform_7(%arg0: i32, %arg1: i32) -> (i32, i32, i32) {
    %c0_i32 = arith.constant 0 : i32
    %c0_i32_0 = arith.constant 0 : i32
    %c0_i32_1 = arith.constant 0 : i32
    return %arg1, %c0_i32, %c0_i32_0 : i32, i32, i32
  }
  func.func @transform_8(%arg0: i32, %arg1: i32) -> (i32, i32, i32) {
    %c0_i32 = arith.constant 0 : i32
    %c0_i32_0 = arith.constant 0 : i32
    %c0_i32_1 = arith.constant 0 : i32
    return %arg1, %c0_i32, %c0_i32_0 : i32, i32, i32
  }
  func.func @transform_9(%arg0: i32, %arg1: i32) -> (i32, i32, i32) {
    %c0_i32 = arith.constant 0 : i32
    %c0_i32_0 = arith.constant 0 : i32
    %c0_i32_1 = arith.constant 0 : i32
    return %arg1, %c0_i32, %c0_i32_0 : i32, i32, i32
  }
  func.func @transform_10(%arg0: i32, %arg1: i32) -> (i32, i32, i32) {
    %c0_i32 = arith.constant 0 : i32
    %c0_i32_0 = arith.constant 0 : i32
    %c0_i32_1 = arith.constant 0 : i32
    return %arg1, %c0_i32, %c0_i32_0 : i32, i32, i32
  }
  func.func @transform_11(%arg0: i32, %arg1: i32) -> (i32, i32, i32) {
    %c0_i32 = arith.constant 0 : i32
    %c0_i32_0 = arith.constant 0 : i32
    %c0_i32_1 = arith.constant 0 : i32
    return %arg1, %c0_i32, %c0_i32_0 : i32, i32, i32
  }
  func.func @transform_12(%arg0: i32, %arg1: i32) -> (i32, i32, i32) {
    %c0_i32 = arith.constant 0 : i32
    %c0_i32_0 = arith.constant 0 : i32
    %c0_i32_1 = arith.constant 0 : i32
    return %arg1, %c0_i32, %c0_i32_0 : i32, i32, i32
  }
  func.func @transform_13(%arg0: i32, %arg1: i32) -> (i32, i32, i32) {
    %c0_i32 = arith.constant 0 : i32
    %c0_i32_0 = arith.constant 0 : i32
    %c0_i32_1 = arith.constant 0 : i32
    return %arg1, %c0_i32, %c0_i32_0 : i32, i32, i32
  }
  func.func @transform_14(%arg0: i32, %arg1: i32) -> (i32, i32, i32) {
    %c0_i32 = arith.constant 0 : i32
    %c0_i32_0 = arith.constant 0 : i32
    %c0_i32_1 = arith.constant 0 : i32
    return %arg1, %c0_i32, %c0_i32_0 : i32, i32, i32
  }
  func.func @transform_15(%arg0: i32, %arg1: i32) -> (i32, i32, i32) {
    %c0_i32 = arith.constant 0 : i32
    %c0_i32_0 = arith.constant 0 : i32
    %c0_i32_1 = arith.constant 0 : i32
    return %arg1, %c0_i32, %c0_i32_0 : i32, i32, i32
  }
  func.func @transform_16(%arg0: i32, %arg1: i32) -> (i32, i32, i32) {
    %c0_i32 = arith.constant 0 : i32
    %c0_i32_0 = arith.constant 0 : i32
    %c0_i32_1 = arith.constant 0 : i32
    return %arg1, %c0_i32, %c0_i32_0 : i32, i32, i32
  }
  func.func @transform_17(%arg0: i32, %arg1: i32) -> (i32, i32, i32) {
    %c0_i32 = arith.constant 0 : i32
    %c0_i32_0 = arith.constant 0 : i32
    %c0_i32_1 = arith.constant 0 : i32
    return %arg1, %c0_i32, %c0_i32_0 : i32, i32, i32
  }
  func.func @transform_18(%arg0: i32, %arg1: i32) -> (i32, i32) {
    %c0_i32 = arith.constant 0 : i32
    %c0_i32_0 = arith.constant 0 : i32
    %c0_i32_1 = arith.constant 0 : i32
    return %c0_i32, %c0_i32_0 : i32, i32
  }
  func.func @transform_19(%arg0: i32, %arg1: i32) -> (i32, i32) {
    %c0_i32 = arith.constant 0 : i32
    %c0_i32_0 = arith.constant 0 : i32
    %c0_i32_1 = arith.constant 0 : i32
    return %c0_i32, %c0_i32_0 : i32, i32
  }
  func.func @transform_20(%arg0: i32, %arg1: i32) -> (i32, i32, i32, i32) {
    %c0_i32 = arith.constant 0 : i32
    %c0_i32_0 = arith.constant 0 : i32
    %c0_i32_1 = arith.constant 0 : i32
    return %arg1, %arg0, %c0_i32, %c0_i32_0 : i32, i32, i32, i32
  }
}

</mosaic_0001>

<llo_original>
// kernel: tpu_custom_call.1
$region0: #{tpu_custom_call.1}
  #allocation0 [shape = 'u32[]', space=smem, size = 0x4, offset = 0x4, fixed_abs, tag = 'smem constant byte address 0x4 - core index']
  #allocation1 [shape = 'u32[144,128]{1,0:T(1,128)}', space=vmem, size = 0x12000, scoped, tag = 'internal scratch']
  #allocation2 [shape = 'f32[17,32]{1,0:T(8,128)}', space=vmem, size = 0x3000, scoped, tag = 'scratch operand']
  %s0 = inlined_call_operand.vmem [shape: f32[2,16,588], index: 0, kind: input, shape index: {}]
  %s1 = inlined_call_operand.vmem [shape: f32[17,32], index: 1, kind: input, shape index: {}]
  %s2 = inlined_call_operand.vmem [shape: f32[588,32], index: 2, kind: input, shape index: {}]
  %s3 = inlined_call_operand.vmem [shape: f32[1,32], index: 3, kind: input, shape index: {}]
  %s4 = inlined_call_operand.vmem [shape: f32[4,1,32], index: 4, kind: input, shape index: {}]
  %s5 = inlined_call_operand.vmem [shape: f32[4,1,32], index: 5, kind: input, shape index: {}]
  %s6 = inlined_call_operand.vmem [shape: f32[4,32,96], index: 6, kind: input, shape index: {}]
  %s7 = inlined_call_operand.vmem [shape: f32[4,1,96], index: 7, kind: input, shape index: {}]
  %s8 = inlined_call_operand.vmem [shape: f32[4,32,32], index: 8, kind: input, shape index: {}]
  %s9 = inlined_call_operand.vmem [shape: f32[4,1,32], index: 9, kind: input, shape index: {}]
  %s10 = inlined_call_operand.vmem [shape: f32[4,1,32], index: 10, kind: input, shape index: {}]
  %s11 = inlined_call_operand.vmem [shape: f32[4,1,32], index: 11, kind: input, shape index: {}]
  %s12 = inlined_call_operand.vmem [shape: f32[4,1,32], index: 12, kind: input, shape index: {}]
  %s13 = inlined_call_operand.vmem [shape: f32[4,32,128], index: 13, kind: input, shape index: {}]
  %s14 = inlined_call_operand.vmem [shape: f32[4,1,128], index: 14, kind: input, shape index: {}]
  %s15 = inlined_call_operand.vmem [shape: f32[4,128,32], index: 15, kind: input, shape index: {}]
  %s16 = inlined_call_operand.vmem [shape: f32[4,1,32], index: 16, kind: input, shape index: {}]
  %s17 = inlined_call_operand.vmem [shape: f32[4,1,32], index: 17, kind: input, shape index: {}]
  %s18 = inlined_call_operand.vmem [shape: f32[1,32], index: 18, kind: input, shape index: {}]
  %s19 = inlined_call_operand.vmem [shape: f32[1,32], index: 19, kind: input, shape index: {}]
  %s20 = inlined_call_operand.vmem [shape: f32[4,2,32,16], index: 20, kind: output, shape index: {}]
  %s21 = sld [smem:[#allocation0]]
  $region117: #{tpu_custom_call.1} parent=0
    _
  %s23 = ssub.s32 1, %s21
  %s24 = scalar_select 0, %s23, %s21
  loop: start=0, step=1, limit=10
  $region2: #{tpu_custom_call.1} parent=0 // loop_pre_header
    _
  $region3: #{tpu_custom_call.1} parent=0 // loop_header
    %s26 = sphi 0, %s30
    %p27 = scmp.ge.s32.totalorder %s26, 10
    %s33 = sphi 0, %s45
    %s34 = sphi 0, %s41
    %s35 = sphi 0, %s33
    %s36 = sphi 0, %s34
    %s37 = sphi 0, %s35
    %s38 = sphi 0, %s36
    %s48 = sphi 0, %s50
    %s51 = sphi 0, %s48
    %s52 = sphi 0, %s51
    %s68 = sphi 0, %s52
    %s72 = sphi 0, %s72
    %s74 = sphi 0, %s72
    %s75 = sphi 0, %s74
    %s89 = sphi 0, %s75
    %s93 = sphi 0, %s93
    %s95 = sphi 0, %s93
    %s96 = sphi 0, %s95
    %s110 = sphi 0, %s96
    %s114 = sphi 0, %s114
    %s116 = sphi 0, %s114
    %s117 = sphi 0, %s116
    %s131 = sphi 0, %s117
    %s137 = sphi 0, %s139
    %s140 = sphi 0, %s137
    %s141 = sphi 0, %s140
    %s157 = sphi 0, %s141
    %s163 = sphi 0, %s165
    %s166 = sphi 0, %s163
    %s167 = sphi 0, %s166
    %s183 = sphi 0, %s167
    %s189 = sphi 0, %s191
    %s192 = sphi 0, %s189
    %s193 = sphi 0, %s192
    %s209 = sphi 0, %s193
    %s215 = sphi 0, %s217
    %s218 = sphi 0, %s215
    %s219 = sphi 0, %s218
    %s235 = sphi 0, %s219
    %s241 = sphi 0, %s243
    %s244 = sphi 0, %s241
    %s245 = sphi 0, %s244
    %s261 = sphi 0, %s245
    %s267 = sphi 0, %s269
    %s270 = sphi 0, %s267
    %s271 = sphi 0, %s270
    %s287 = sphi 0, %s271
    %s293 = sphi 0, %s295
    %s296 = sphi 0, %s293
    %s297 = sphi 0, %s296
    %s313 = sphi 0, %s297
    %s319 = sphi 0, %s321
    %s322 = sphi 0, %s319
    %s323 = sphi 0, %s322
    %s339 = sphi 0, %s323
    %s345 = sphi 0, %s347
    %s348 = sphi 0, %s345
    %s349 = sphi 0, %s348
    %s365 = sphi 0, %s349
    %s371 = sphi 0, %s373
    %s374 = sphi 0, %s371
    %s375 = sphi 0, %s374
    %s391 = sphi 0, %s375
    %s397 = sphi 0, %s399
    %s400 = sphi 0, %s397
    %s401 = sphi 0, %s400
    %s417 = sphi 0, %s401
    %s423 = sphi 0, %s425
    %s426 = sphi 0, %s423
    %s427 = sphi 0, %s426
    %s443 = sphi 0, %s427
    %s449 = sphi 0, %s451
    %s452 = sphi 0, %s449
    %s453 = sphi 0, %s452
    %s469 = sphi 0, %s453
    %s475 = sphi 0, %s477
    %s478 = sphi 0, %s475
    %s479 = sphi 0, %s478
    %s495 = sphi 0, %s479
    %s499 = sphi 0, %s499
    %s501 = sphi 0, %s499
    %s502 = sphi 0, %s501
    %s516 = sphi 0, %s502
    %s520 = sphi 0, %s520
    %s522 = sphi 0, %s520
    %s523 = sphi 0, %s522
    %s537 = sphi 0, %s523
    %s545 = sphi 0, %s547
    %s548 = sphi 0, %s545
    %s549 = sphi 0, %s548
    %s565 = sphi 0, %s549
  $region4: #{tpu_custom_call.1} parent=0 // loop_header_branch
    %29 = sbr.rel (%p27) target = $region8
  $region5: #{tpu_custom_call.1} parent=0 // loop_body
    %s31 = ssub.s32 %s26, 1
    %s32 = ssub.s32 %s26, 2
    %s39 = sadd.s32 1, %s34
    %p40 = scmp.ge.s32.totalorder %s39, 4
    %s41 = scalar_select %p40, 0, %s39
    %s42 = sadd.s32 1, %s33
    %s43 = scalar_select %p40, %s42, %s33
    %p44 = scmp.ge.s32.totalorder %s43, 2
    %s45 = scalar_select %p44, 0, %s43
    %s46 = ssub.s32 %s33, %s45
    %p47 = scmp.eq.s32.totalorder %s46, 0
    %s49 = sadd.s32 %s48, 1
    %s50 = scalar_select %p47, %s48, %s49
    %p53 = pneg %p47
    %p54 = scmp.eq.s32.totalorder %s26, 7
    %p55 = por %p53, %p54
    %p56 = scmp.ne.s32.totalorder %s48, %s51
    %p57 = scmp.eq.s32.totalorder %s26, 0
    %p58 = por %p56, %p57
    %p59 = scmp.ne.s32.totalorder %s48, %s51
    %p60 = scmp.eq.s32.totalorder %s31, 7
    %p61 = por %p59, %p60
    %p62 = scmp.ne.s32.totalorder %s51, %s52
    %p63 = scmp.eq.s32.totalorder %s31, 0
    %p64 = por %p62, %p63
    %p65 = scmp.ne.s32.totalorder %s51, %s52
    %p66 = scmp.eq.s32.totalorder %s32, 7
    %p67 = por %p65, %p66
    %p69 = scmp.ne.s32.totalorder %s52, %s68
    %p70 = scmp.eq.s32.totalorder %s32, 0
    %p71 = por %p69, %p70
    %s73 = sadd.s32 %s72, 1
    %p76 = scmp.eq.s32.totalorder %s26, 7
    %p77 = scmp.ne.s32.totalorder %s72, %s74
    %p78 = scmp.eq.s32.totalorder %s26, 0
    %p79 = por %p77, %p78
    %p80 = scmp.ne.s32.totalorder %s72, %s74
    %p81 = scmp.eq.s32.totalorder %s31, 7
    %p82 = por %p80, %p81
    %p83 = scmp.ne.s32.totalorder %s74, %s75
    %p84 = scmp.eq.s32.totalorder %s31, 0
    %p85 = por %p83, %p84
    %p86 = scmp.ne.s32.totalorder %s74, %s75
    %p87 = scmp.eq.s32.totalorder %s32, 7
    %p88 = por %p86, %p87
    %p90 = scmp.ne.s32.totalorder %s75, %s89
    %p91 = scmp.eq.s32.totalorder %s32, 0
    %p92 = por %p90, %p91
    %s94 = sadd.s32 %s93, 1
    %p97 = scmp.eq.s32.totalorder %s26, 7
    %p98 = scmp.ne.s32.totalorder %s93, %s95
    %p99 = scmp.eq.s32.totalorder %s26, 0
    %p100 = por %p98, %p99
    %p101 = scmp.ne.s32.totalorder %s93, %s95
    %p102 = scmp.eq.s32.totalorder %s31, 7
    %p103 = por %p101, %p102
    %p104 = scmp.ne.s32.totalorder %s95, %s96
    %p105 = scmp.eq.s32.totalorder %s31, 0
    %p106 = por %p104, %p105
    %p107 = scmp.ne.s32.totalorder %s95, %s96
    %p108 = scmp.eq.s32.totalorder %s32, 7
    %p109 = por %p107, %p108
    %p111 = scmp.ne.s32.totalorder %s96, %s110
    %p112 = scmp.eq.s32.totalorder %s32, 0
    %p113 = por %p111, %p112
    %s115 = sadd.s32 %s114, 1
    %p118 = scmp.eq.s32.totalorder %s26, 7
    %p119 = scmp.ne.s32.totalorder %s114, %s116
    %p120 = scmp.eq.s32.totalorder %s26, 0
    %p121 = por %p119, %p120
    %p122 = scmp.ne.s32.totalorder %s114, %s116
    %p123 = scmp.eq.s32.totalorder %s31, 7
    %p124 = por %p122, %p123
    %p125 = scmp.ne.s32.totalorder %s116, %s117
    %p126 = scmp.eq.s32.totalorder %s31, 0
    %p127 = por %p125, %p126
    %p128 = scmp.ne.s32.totalorder %s116, %s117
    %p129 = scmp.eq.s32.totalorder %s32, 7
    %p130 = por %p128, %p129
    %p132 = scmp.ne.s32.totalorder %s117, %s131
    %p133 = scmp.eq.s32.totalorder %s32, 0
    %p134 = por %p132, %p133
    %s135 = ssub.s32 %s34, %s41
    %p136 = scmp.eq.s32.totalorder %s135, 0
    %s138 = sadd.s32 %s137, 1
    %s139 = scalar_select %p136, %s137, %s138
    %p142 = pneg %p136
    %p143 = scmp.eq.s32.totalorder %s26, 7
    %p144 = por %p142, %p143
    %p145 = scmp.ne.s32.totalorder %s137, %s140
    %p146 = scmp.eq.s32.totalorder %s26, 0
    %p147 = por %p145, %p146
    %p148 = scmp.ne.s32.totalorder %s137, %s140
    %p149 = scmp.eq.s32.totalorder %s31, 7
    %p150 = por %p148, %p149
    %p151 = scmp.ne.s32.totalorder %s140, %s141
    %p152 = scmp.eq.s32.totalorder %s31, 0
    %p153 = por %p151, %p152
    %p154 = scmp.ne.s32.totalorder %s140, %s141
    %p155 = scmp.eq.s32.totalorder %s32, 7
    %p156 = por %p154, %p155
    %p158 = scmp.ne.s32.totalorder %s141, %s157
    %p159 = scmp.eq.s32.totalorder %s32, 0
    %p160 = por %p158, %p159
    %s161 = ssub.s32 %s34, %s41
    %p162 = scmp.eq.s32.totalorder %s161, 0
    %s164 = sadd.s32 %s163, 1
    %s165 = scalar_select %p162, %s163, %s164
    %p168 = pneg %p162
    %p169 = scmp.eq.s32.totalorder %s26, 7
    %p170 = por %p168, %p169
    %p171 = scmp.ne.s32.totalorder %s163, %s166
    %p172 = scmp.eq.s32.totalorder %s26, 0
    %p173 = por %p171, %p172
    %p174 = scmp.ne.s32.totalorder %s163, %s166
    %p175 = scmp.eq.s32.totalorder %s31, 7
    %p176 = por %p174, %p175
    %p177 = scmp.ne.s32.totalorder %s166, %s167
    %p178 = scmp.eq.s32.totalorder %s31, 0
    %p179 = por %p177, %p178
    %p180 = scmp.ne.s32.totalorder %s166, %s167
    %p181 = scmp.eq.s32.totalorder %s32, 7
    %p182 = por %p180, %p181
    %p184 = scmp.ne.s32.totalorder %s167, %s183
    %p185 = scmp.eq.s32.totalorder %s32, 0
    %p186 = por %p184, %p185
    %s187 = ssub.s32 %s34, %s41
    %p188 = scmp.eq.s32.totalorder %s187, 0
    %s190 = sadd.s32 %s189, 1
    %s191 = scalar_select %p188, %s189, %s190
    %p194 = pneg %p188
    %p195 = scmp.eq.s32.totalorder %s26, 7
    %p196 = por %p194, %p195
    %p197 = scmp.ne.s32.totalorder %s189, %s192
    %p198 = scmp.eq.s32.totalorder %s26, 0
    %p199 = por %p197, %p198
    %p200 = scmp.ne.s32.totalorder %s189, %s192
    %p201 = scmp.eq.s32.totalorder %s31, 7
    %p202 = por %p200, %p201
    %p203 = scmp.ne.s32.totalorder %s192, %s193
    %p204 = scmp.eq.s32.totalorder %s31, 0
    %p205 = por %p203, %p204
    %p206 = scmp.ne.s32.totalorder %s192, %s193
    %p207 = scmp.eq.s32.totalorder %s32, 7
    %p208 = por %p206, %p207
    %p210 = scmp.ne.s32.totalorder %s193, %s209
    %p211 = scmp.eq.s32.totalorder %s32, 0
    %p212 = por %p210, %p211
    %s213 = ssub.s32 %s34, %s41
    %p214 = scmp.eq.s32.totalorder %s213, 0
    %s216 = sadd.s32 %s215, 1
    %s217 = scalar_select %p214, %s215, %s216
    %p220 = pneg %p214
    %p221 = scmp.eq.s32.totalorder %s26, 7
    %p222 = por %p220, %p221
    %p223 = scmp.ne.s32.totalorder %s215, %s218
    %p224 = scmp.eq.s32.totalorder %s26, 0
    %p225 = por %p223, %p224
    %p226 = scmp.ne.s32.totalorder %s215, %s218
    %p227 = scmp.eq.s32.totalorder %s31, 7
    %p228 = por %p226, %p227
    %p229 = scmp.ne.s32.totalorder %s218, %s219
    %p230 = scmp.eq.s32.totalorder %s31, 0
    %p231 = por %p229, %p230
    %p232 = scmp.ne.s32.totalorder %s218, %s219
    %p233 = scmp.eq.s32.totalorder %s32, 7
    %p234 = por %p232, %p233
    %p236 = scmp.ne.s32.totalorder %s219, %s235
    %p237 = scmp.eq.s32.totalorder %s32, 0
    %p238 = por %p236, %p237
    %s239 = ssub.s32 %s34, %s41
    %p240 = scmp.eq.s32.totalorder %s239, 0
    %s242 = sadd.s32 %s241, 1
    %s243 = scalar_select %p240, %s241, %s242
    %p246 = pneg %p240
    %p247 = scmp.eq.s32.totalorder %s26, 7
    %p248 = por %p246, %p247
    %p249 = scmp.ne.s32.totalorder %s241, %s244
    %p250 = scmp.eq.s32.totalorder %s26, 0
    %p251 = por %p249, %p250
    %p252 = scmp.ne.s32.totalorder %s241, %s244
    %p253 = scmp.eq.s32.totalorder %s31, 7
    %p254 = por %p252, %p253
    %p255 = scmp.ne.s32.totalorder %s244, %s245
    %p256 = scmp.eq.s32.totalorder %s31, 0
    %p257 = por %p255, %p256
    %p258 = scmp.ne.s32.totalorder %s244, %s245
    %p259 = scmp.eq.s32.totalorder %s32, 7
    %p260 = por %p258, %p259
    %p262 = scmp.ne.s32.totalorder %s245, %s261
    %p263 = scmp.eq.s32.totalorder %s32, 0
    %p264 = por %p262, %p263
    %s265 = ssub.s32 %s34, %s41
    %p266 = scmp.eq.s32.totalorder %s265, 0
    %s268 = sadd.s32 %s267, 1
    %s269 = scalar_select %p266, %s267, %s268
    %p272 = pneg %p266
    %p273 = scmp.eq.s32.totalorder %s26, 7
    %p274 = por %p272, %p273
    %p275 = scmp.ne.s32.totalorder %s267, %s270
    %p276 = scmp.eq.s32.totalorder %s26, 0
    %p277 = por %p275, %p276
    %p278 = scmp.ne.s32.totalorder %s267, %s270
    %p279 = scmp.eq.s32.totalorder %s31, 7
    %p280 = por %p278, %p279
    %p281 = scmp.ne.s32.totalorder %s270, %s271
    %p282 = scmp.eq.s32.totalorder %s31, 0
    %p283 = por %p281, %p282
    %p284 = scmp.ne.s32.totalorder %s270, %s271
    %p285 = scmp.eq.s32.totalorder %s32, 7
    %p286 = por %p284, %p285
    %p288 = scmp.ne.s32.totalorder %s271, %s287
    %p289 = scmp.eq.s32.totalorder %s32, 0
    %p290 = por %p288, %p289
    %s291 = ssub.s32 %s34, %s41
    %p292 = scmp.eq.s32.totalorder %s291, 0
    %s294 = sadd.s32 %s293, 1
    %s295 = scalar_select %p292, %s293, %s294
    %p298 = pneg %p292
    %p299 = scmp.eq.s32.totalorder %s26, 7
    %p300 = por %p298, %p299
    %p301 = scmp.ne.s32.totalorder %s293, %s296
    %p302 = scmp.eq.s32.totalorder %s26, 0
    %p303 = por %p301, %p302
    %p304 = scmp.ne.s32.totalorder %s293, %s296
    %p305 = scmp.eq.s32.totalorder %s31, 7
    %p306 = por %p304, %p305
    %p307 = scmp.ne.s32.totalorder %s296, %s297
    %p308 = scmp.eq.s32.totalorder %s31, 0
    %p309 = por %p307, %p308
    %p310 = scmp.ne.s32.totalorder %s296, %s297
    %p311 = scmp.eq.s32.totalorder %s32, 7
    %p312 = por %p310, %p311
    %p314 = scmp.ne.s32.totalorder %s297, %s313
    %p315 = scmp.eq.s32.totalorder %s32, 0
    %p316 = por %p314, %p315
    %s317 = ssub.s32 %s34, %s41
    %p318 = scmp.eq.s32.totalorder %s317, 0
    %s320 = sadd.s32 %s319, 1
    %s321 = scalar_select %p318, %s319, %s320
    %p324 = pneg %p318
    %p325 = scmp.eq.s32.totalorder %s26, 7
    %p326 = por %p324, %p325
    %p327 = scmp.ne.s32.totalorder %s319, %s322
    %p328 = scmp.eq.s32.totalorder %s26, 0
    %p329 = por %p327, %p328
    %p330 = scmp.ne.s32.totalorder %s319, %s322
    %p331 = scmp.eq.s32.totalorder %s31, 7
    %p332 = por %p330, %p331
    %p333 = scmp.ne.s32.totalorder %s322, %s323
    %p334 = scmp.eq.s32.totalorder %s31, 0
    %p335 = por %p333, %p334
    %p336 = scmp.ne.s32.totalorder %s322, %s323
    %p337 = scmp.eq.s32.totalorder %s32, 7
    %p338 = por %p336, %p337
    %p340 = scmp.ne.s32.totalorder %s323, %s339
    %p341 = scmp.eq.s32.totalorder %s32, 0
    %p342 = por %p340, %p341
    %s343 = ssub.s32 %s34, %s41
    %p344 = scmp.eq.s32.totalorder %s343, 0
    %s346 = sadd.s32 %s345, 1
    %s347 = scalar_select %p344, %s345, %s346
    %p350 = pneg %p344
    %p351 = scmp.eq.s32.totalorder %s26, 7
    %p352 = por %p350, %p351
    %p353 = scmp.ne.s32.totalorder %s345, %s348
    %p354 = scmp.eq.s32.totalorder %s26, 0
    %p355 = por %p353, %p354
    %p356 = scmp.ne.s32.totalorder %s345, %s348
    %p357 = scmp.eq.s32.totalorder %s31, 7
    %p358 = por %p356, %p357
    %p359 = scmp.ne.s32.totalorder %s348, %s349
    %p360 = scmp.eq.s32.totalorder %s31, 0
    %p361 = por %p359, %p360
    %p362 = scmp.ne.s32.totalorder %s348, %s349
    %p363 = scmp.eq.s32.totalorder %s32, 7
    %p364 = por %p362, %p363
    %p366 = scmp.ne.s32.totalorder %s349, %s365
    %p367 = scmp.eq.s32.totalorder %s32, 0
    %p368 = por %p366, %p367
    %s369 = ssub.s32 %s34, %s41
    %p370 = scmp.eq.s32.totalorder %s369, 0
    %s372 = sadd.s32 %s371, 1
    %s373 = scalar_select %p370, %s371, %s372
    %p376 = pneg %p370
    %p377 = scmp.eq.s32.totalorder %s26, 7
    %p378 = por %p376, %p377
    %p379 = scmp.ne.s32.totalorder %s371, %s374
    %p380 = scmp.eq.s32.totalorder %s26, 0
    %p381 = por %p379, %p380
    %p382 = scmp.ne.s32.totalorder %s371, %s374
    %p383 = scmp.eq.s32.totalorder %s31, 7
    %p384 = por %p382, %p383
    %p385 = scmp.ne.s32.totalorder %s374, %s375
    %p386 = scmp.eq.s32.totalorder %s31, 0
    %p387 = por %p385, %p386
    %p388 = scmp.ne.s32.totalorder %s374, %s375
    %p389 = scmp.eq.s32.totalorder %s32, 7
    %p390 = por %p388, %p389
    %p392 = scmp.ne.s32.totalorder %s375, %s391
    %p393 = scmp.eq.s32.totalorder %s32, 0
    %p394 = por %p392, %p393
    %s395 = ssub.s32 %s34, %s41
    %p396 = scmp.eq.s32.totalorder %s395, 0
    %s398 = sadd.s32 %s397, 1
    %s399 = scalar_select %p396, %s397, %s398
    %p402 = pneg %p396
    %p403 = scmp.eq.s32.totalorder %s26, 7
    %p404 = por %p402, %p403
    %p405 = scmp.ne.s32.totalorder %s397, %s400
    %p406 = scmp.eq.s32.totalorder %s26, 0
    %p407 = por %p405, %p406
    %p408 = scmp.ne.s32.totalorder %s397, %s400
    %p409 = scmp.eq.s32.totalorder %s31, 7
    %p410 = por %p408, %p409
    %p411 = scmp.ne.s32.totalorder %s400, %s401
    %p412 = scmp.eq.s32.totalorder %s31, 0
    %p413 = por %p411, %p412
    %p414 = scmp.ne.s32.totalorder %s400, %s401
    %p415 = scmp.eq.s32.totalorder %s32, 7
    %p416 = por %p414, %p415
    %p418 = scmp.ne.s32.totalorder %s401, %s417
    %p419 = scmp.eq.s32.totalorder %s32, 0
    %p420 = por %p418, %p419
    %s421 = ssub.s32 %s34, %s41
    %p422 = scmp.eq.s32.totalorder %s421, 0
    %s424 = sadd.s32 %s423, 1
    %s425 = scalar_select %p422, %s423, %s424
    %p428 = pneg %p422
    %p429 = scmp.eq.s32.totalorder %s26, 7
    %p430 = por %p428, %p429
    %p431 = scmp.ne.s32.totalorder %s423, %s426
    %p432 = scmp.eq.s32.totalorder %s26, 0
    %p433 = por %p431, %p432
    %p434 = scmp.ne.s32.totalorder %s423, %s426
    %p435 = scmp.eq.s32.totalorder %s31, 7
    %p436 = por %p434, %p435
    %p437 = scmp.ne.s32.totalorder %s426, %s427
    %p438 = scmp.eq.s32.totalorder %s31, 0
    %p439 = por %p437, %p438
    %p440 = scmp.ne.s32.totalorder %s426, %s427
    %p441 = scmp.eq.s32.totalorder %s32, 7
    %p442 = por %p440, %p441
    %p444 = scmp.ne.s32.totalorder %s427, %s443
    %p445 = scmp.eq.s32.totalorder %s32, 0
    %p446 = por %p444, %p445
    %s447 = ssub.s32 %s34, %s41
    %p448 = scmp.eq.s32.totalorder %s447, 0
    %s450 = sadd.s32 %s449, 1
    %s451 = scalar_select %p448, %s449, %s450
    %p454 = pneg %p448
    %p455 = scmp.eq.s32.totalorder %s26, 7
    %p456 = por %p454, %p455
    %p457 = scmp.ne.s32.totalorder %s449, %s452
    %p458 = scmp.eq.s32.totalorder %s26, 0
    %p459 = por %p457, %p458
    %p460 = scmp.ne.s32.totalorder %s449, %s452
    %p461 = scmp.eq.s32.totalorder %s31, 7
    %p462 = por %p460, %p461
    %p463 = scmp.ne.s32.totalorder %s452, %s453
    %p464 = scmp.eq.s32.totalorder %s31, 0
    %p465 = por %p463, %p464
    %p466 = scmp.ne.s32.totalorder %s452, %s453
    %p467 = scmp.eq.s32.totalorder %s32, 7
    %p468 = por %p466, %p467
    %p470 = scmp.ne.s32.totalorder %s453, %s469
    %p471 = scmp.eq.s32.totalorder %s32, 0
    %p472 = por %p470, %p471
    %s473 = ssub.s32 %s34, %s41
    %p474 = scmp.eq.s32.totalorder %s473, 0
    %s476 = sadd.s32 %s475, 1
    %s477 = scalar_select %p474, %s475, %s476
    %p480 = pneg %p474
    %p481 = scmp.eq.s32.totalorder %s26, 7
    %p482 = por %p480, %p481
    %p483 = scmp.ne.s32.totalorder %s475, %s478
    %p484 = scmp.eq.s32.totalorder %s26, 0
    %p485 = por %p483, %p484
    %p486 = scmp.ne.s32.totalorder %s475, %s478
    %p487 = scmp.eq.s32.totalorder %s31, 7
    %p488 = por %p486, %p487
    %p489 = scmp.ne.s32.totalorder %s478, %s479
    %p490 = scmp.eq.s32.totalorder %s31, 0
    %p491 = por %p489, %p490
    %p492 = scmp.ne.s32.totalorder %s478, %s479
    %p493 = scmp.eq.s32.totalorder %s32, 7
    %p494 = por %p492, %p493
    %p496 = scmp.ne.s32.totalorder %s479, %s495
    %p497 = scmp.eq.s32.totalorder %s32, 0
    %p498 = por %p496, %p497
    %s500 = sadd.s32 %s499, 1
    %p503 = scmp.eq.s32.totalorder %s26, 7
    %p504 = scmp.ne.s32.totalorder %s499, %s501
    %p505 = scmp.eq.s32.totalorder %s26, 0
    %p506 = por %p504, %p505
    %p507 = scmp.ne.s32.totalorder %s499, %s501
    %p508 = scmp.eq.s32.totalorder %s31, 7
    %p509 = por %p507, %p508
    %p510 = scmp.ne.s32.totalorder %s501, %s502
    %p511 = scmp.eq.s32.totalorder %s31, 0
    %p512 = por %p510, %p511
    %p513 = scmp.ne.s32.totalorder %s501, %s502
    %p514 = scmp.eq.s32.totalorder %s32, 7
    %p515 = por %p513, %p514
    %p517 = scmp.ne.s32.totalorder %s502, %s516
    %p518 = scmp.eq.s32.totalorder %s32, 0
    %p519 = por %p517, %p518
    %s521 = sadd.s32 %s520, 1
    %p524 = scmp.eq.s32.totalorder %s26, 7
    %p525 = scmp.ne.s32.totalorder %s520, %s522
    %p526 = scmp.eq.s32.totalorder %s26, 0
    %p527 = por %p525, %p526
    %p528 = scmp.ne.s32.totalorder %s520, %s522
    %p529 = scmp.eq.s32.totalorder %s31, 7
    %p530 = por %p528, %p529
    %p531 = scmp.ne.s32.totalorder %s522, %s523
    %p532 = scmp.eq.s32.totalorder %s31, 0
    %p533 = por %p531, %p532
    %p534 = scmp.ne.s32.totalorder %s522, %s523
    %p535 = scmp.eq.s32.totalorder %s32, 7
    %p536 = por %p534, %p535
    %p538 = scmp.ne.s32.totalorder %s523, %s537
    %p539 = scmp.eq.s32.totalorder %s32, 0
    %p540 = por %p538, %p539
    %s541 = ssub.s32 %s34, %s41
    %s542 = ssub.s32 %s33, %s45
    %s543 = sor.u32 %s541, %s542
    %p544 = scmp.eq.s32.totalorder %s543, 0
    %s546 = sadd.s32 %s545, 1
    %s547 = scalar_select %p544, %s545, %s546
    %p550 = pneg %p544
    %p551 = scmp.eq.s32.totalorder %s26, 7
    %p552 = por %p550, %p551
    %p553 = scmp.ne.s32.totalorder %s545, %s548
    %p554 = scmp.eq.s32.totalorder %s26, 0
    %p555 = por %p553, %p554
    %p556 = scmp.ne.s32.totalorder %s545, %s548
    %p557 = scmp.eq.s32.totalorder %s31, 7
    %p558 = por %p556, %p557
    %p559 = scmp.ne.s32.totalorder %s548, %s549
    %p560 = scmp.eq.s32.totalorder %s31, 0
    %p561 = por %p559, %p560
    %p562 = scmp.ne.s32.totalorder %s548, %s549
    %p563 = scmp.eq.s32.totalorder %s32, 7
    %p564 = por %p562, %p563
    %p566 = scmp.ne.s32.totalorder %s549, %s565
    %p567 = scmp.eq.s32.totalorder %s32, 0
    %p568 = por %p566, %p567
    %p569 = scmp.le.s32.totalorder 1, %s26
    %p570 = scmp.lt.s32.totalorder %s26, 9
    %p571 = pnand %p569, %p570
    %p572 = pneg %p571
    // Predicated region
    $region9: #{tpu_custom_call.1} parent=5 // pred_check
      _
    $region10: #{tpu_custom_call.1} parent=5 // pred_check_branch
      %574 = sbr.rel (%p571) target = $region12
    $region11: #{tpu_custom_call.1} parent=5 // pred_region
      %s575 = ssub.s32 %s26, 1
      // Predicated region
      $region13: #{tpu_custom_call.1} parent=11 // pred_check
        %p576 = pneg %p85
      $region14: #{tpu_custom_call.1} parent=11 // pred_check_branch
        %578 = sbr.rel (%p576) target = $region16
      $region15: #{tpu_custom_call.1} parent=11 // pred_region
        _
      $region16: #{tpu_custom_call.1} parent=11 // pred_fallthru
        _
      // Predicated region
      $region17: #{tpu_custom_call.1} parent=11 // pred_check
        %p579 = pneg %p106
      $region18: #{tpu_custom_call.1} parent=11 // pred_check_branch
        %581 = sbr.rel (%p579) target = $region20
      $region19: #{tpu_custom_call.1} parent=11 // pred_region
        _
      $region20: #{tpu_custom_call.1} parent=11 // pred_fallthru
        _
      // Predicated region
      $region21: #{tpu_custom_call.1} parent=11 // pred_check
        %p582 = pneg %p127
      $region22: #{tpu_custom_call.1} parent=11 // pred_check_branch
        %584 = sbr.rel (%p582) target = $region24
      $region23: #{tpu_custom_call.1} parent=11 // pred_region
        _
      $region24: #{tpu_custom_call.1} parent=11 // pred_fallthru
        _
      // Predicated region
      $region25: #{tpu_custom_call.1} parent=11 // pred_check
        %p585 = pneg %p512
      $region26: #{tpu_custom_call.1} parent=11 // pred_check_branch
        %587 = sbr.rel (%p585) target = $region28
      $region27: #{tpu_custom_call.1} parent=11 // pred_region
        _
      $region28: #{tpu_custom_call.1} parent=11 // pred_fallthru
        _
      // Predicated region
      $region29: #{tpu_custom_call.1} parent=11 // pred_check
        %p588 = pneg %p533
      $region30: #{tpu_custom_call.1} parent=11 // pred_check_branch
        %590 = sbr.rel (%p588) target = $region32
      $region31: #{tpu_custom_call.1} parent=11 // pred_region
        _
      $region32: #{tpu_custom_call.1} parent=11 // pred_fallthru
        _
    $region12: #{tpu_custom_call.1} parent=5 // pred_fallthru
      _
    %p591 = scmp.lt.s32.totalorder %s26, 8
    // Predicated region
    $region33: #{tpu_custom_call.1} parent=5 // pred_check
      %p592 = pneg %p591
    $region34: #{tpu_custom_call.1} parent=5 // pred_check_branch
      %594 = sbr.rel (%p592) target = $region36
    $region35: #{tpu_custom_call.1} parent=5 // pred_region
      // Predicated region
      $region37: #{tpu_custom_call.1} parent=35 // pred_check
        %p595 = pneg %p58
      $region38: #{tpu_custom_call.1} parent=35 // pred_check_branch
        %597 = sbr.rel (%p595) target = $region40
      $region39: #{tpu_custom_call.1} parent=35 // pred_region
        %p598 = scmp.lt.s32.totalorder %s33, 1
        %s599 = scalar_select %p598, %s33, 1
        %s600 = smul.addr %s599, 10
        %s601 = smul.addr %s600, 8
        %s602 = scalar_lea.vmem %s0, %s601
      $region40: #{tpu_custom_call.1} parent=35 // pred_fallthru
        _
      // Predicated region
      $region41: #{tpu_custom_call.1} parent=35 // pred_check
        %p603 = pneg %p147
      $region42: #{tpu_custom_call.1} parent=35 // pred_check_branch
        %605 = sbr.rel (%p603) target = $region44
      $region43: #{tpu_custom_call.1} parent=35 // pred_region
        %p606 = scmp.lt.s32.totalorder %s34, 3
        %s607 = scalar_select %p606, %s34, 3
        %s608 = scalar_lea.vmem %s4, %s607
      $region44: #{tpu_custom_call.1} parent=35 // pred_fallthru
        _
      // Predicated region
      $region45: #{tpu_custom_call.1} parent=35 // pred_check
        %p609 = pneg %p173
      $region46: #{tpu_custom_call.1} parent=35 // pred_check_branch
        %611 = sbr.rel (%p609) target = $region48
      $region47: #{tpu_custom_call.1} parent=35 // pred_region
        %p612 = scmp.lt.s32.totalorder %s34, 3
        %s613 = scalar_select %p612, %s34, 3
        %s614 = scalar_lea.vmem %s5, %s613
      $region48: #{tpu_custom_call.1} parent=35 // pred_fallthru
        _
      // Predicated region
      $region49: #{tpu_custom_call.1} parent=35 // pred_check
        %p615 = pneg %p199
      $region50: #{tpu_custom_call.1} parent=35 // pred_check_branch
        %617 = sbr.rel (%p615) target = $region52
      $region51: #{tpu_custom_call.1} parent=35 // pred_region
        %p618 = scmp.lt.s32.totalorder %s34, 3
        %s619 = scalar_select %p618, %s34, 3
        %s620 = smul.addr %s619, 4
        %s621 = smul.addr %s620, 8
        %s622 = scalar_lea.vmem %s6, %s621
      $region52: #{tpu_custom_call.1} parent=35 // pred_fallthru
        _
      // Predicated region
      $region53: #{tpu_custom_call.1} parent=35 // pred_check
        %p623 = pneg %p225
      $region54: #{tpu_custom_call.1} parent=35 // pred_check_branch
        %625 = sbr.rel (%p623) target = $region56
      $region55: #{tpu_custom_call.1} parent=35 // pred_region
        %p626 = scmp.lt.s32.totalorder %s34, 3
        %s627 = scalar_select %p626, %s34, 3
        %s628 = scalar_lea.vmem %s7, %s627
      $region56: #{tpu_custom_call.1} parent=35 // pred_fallthru
        _
      // Predicated region
      $region57: #{tpu_custom_call.1} parent=35 // pred_check
        %p629 = pneg %p251
      $region58: #{tpu_custom_call.1} parent=35 // pred_check_branch
        %631 = sbr.rel (%p629) target = $region60
      $region59: #{tpu_custom_call.1} parent=35 // pred_region
        %p632 = scmp.lt.s32.totalorder %s34, 3
        %s633 = scalar_select %p632, %s34, 3
        %s634 = smul.addr %s633, 4
        %s635 = smul.addr %s634, 8
        %s636 = scalar_lea.vmem %s8, %s635
      $region60: #{tpu_custom_call.1} parent=35 // pred_fallthru
        _
      // Predicated region
      $region61: #{tpu_custom_call.1} parent=35 // pred_check
        %p637 = pneg %p277
      $region62: #{tpu_custom_call.1} parent=35 // pred_check_branch
        %639 = sbr.rel (%p637) target = $region64
      $region63: #{tpu_custom_call.1} parent=35 // pred_region
        %p640 = scmp.lt.s32.totalorder %s34, 3
        %s641 = scalar_select %p640, %s34, 3
        %s642 = scalar_lea.vmem %s9, %s641
      $region64: #{tpu_custom_call.1} parent=35 // pred_fallthru
        _
      // Predicated region
      $region65: #{tpu_custom_call.1} parent=35 // pred_check
        %p643 = pneg %p303
      $region66: #{tpu_custom_call.1} parent=35 // pred_check_branch
        %645 = sbr.rel (%p643) target = $region68
      $region67: #{tpu_custom_call.1} parent=35 // pred_region
        %p646 = scmp.lt.s32.totalorder %s34, 3
        %s647 = scalar_select %p646, %s34, 3
        %s648 = scalar_lea.vmem %s10, %s647
      $region68: #{tpu_custom_call.1} parent=35 // pred_fallthru
        _
      // Predicated region
      $region69: #{tpu_custom_call.1} parent=35 // pred_check
        %p649 = pneg %p329
      $region70: #{tpu_custom_call.1} parent=35 // pred_check_branch
        %651 = sbr.rel (%p649) target = $region72
      $region71: #{tpu_custom_call.1} parent=35 // pred_region
        %p652 = scmp.lt.s32.totalorder %s34, 3
        %s653 = scalar_select %p652, %s34, 3
        %s654 = scalar_lea.vmem %s11, %s653
      $region72: #{tpu_custom_call.1} parent=35 // pred_fallthru
        _
      // Predicated region
      $region73: #{tpu_custom_call.1} parent=35 // pred_check
        %p655 = pneg %p355
      $region74: #{tpu_custom_call.1} parent=35 // pred_check_branch
        %657 = sbr.rel (%p655) target = $region76
      $region75: #{tpu_custom_call.1} parent=35 // pred_region
        %p658 = scmp.lt.s32.totalorder %s34, 3
        %s659 = scalar_select %p658, %s34, 3
        %s660 = scalar_lea.vmem %s12, %s659
      $region76: #{tpu_custom_call.1} parent=35 // pred_fallthru
        _
      // Predicated region
      $region77: #{tpu_custom_call.1} parent=35 // pred_check
        %p661 = pneg %p381
      $region78: #{tpu_custom_call.1} parent=35 // pred_check_branch
        %663 = sbr.rel (%p661) target = $region80
      $region79: #{tpu_custom_call.1} parent=35 // pred_region
        %p664 = scmp.lt.s32.totalorder %s34, 3
        %s665 = scalar_select %p664, %s34, 3
        %s666 = smul.addr %s665, 4
        %s667 = smul.addr %s666, 8
        %s668 = scalar_lea.vmem %s13, %s667
      $region80: #{tpu_custom_call.1} parent=35 // pred_fallthru
        _
      // Predicated region
      $region81: #{tpu_custom_call.1} parent=35 // pred_check
        %p669 = pneg %p407
      $region82: #{tpu_custom_call.1} parent=35 // pred_check_branch
        %671 = sbr.rel (%p669) target = $region84
      $region83: #{tpu_custom_call.1} parent=35 // pred_region
        %p672 = scmp.lt.s32.totalorder %s34, 3
        %s673 = scalar_select %p672, %s34, 3
        %s674 = scalar_lea.vmem %s14, %s673
      $region84: #{tpu_custom_call.1} parent=35 // pred_fallthru
        _
      // Predicated region
      $region85: #{tpu_custom_call.1} parent=35 // pred_check
        %p675 = pneg %p433
      $region86: #{tpu_custom_call.1} parent=35 // pred_check_branch
        %677 = sbr.rel (%p675) target = $region88
      $region87: #{tpu_custom_call.1} parent=35 // pred_region
        %p678 = scmp.lt.s32.totalorder %s34, 3
        %s679 = scalar_select %p678, %s34, 3
        %s680 = smul.addr %s679, 16
        %s681 = smul.addr %s680, 8
        %s682 = scalar_lea.vmem %s15, %s681
      $region88: #{tpu_custom_call.1} parent=35 // pred_fallthru
        _
      // Predicated region
      $region89: #{tpu_custom_call.1} parent=35 // pred_check
        %p683 = pneg %p459
      $region90: #{tpu_custom_call.1} parent=35 // pred_check_branch
        %685 = sbr.rel (%p683) target = $region92
      $region91: #{tpu_custom_call.1} parent=35 // pred_region
        %p686 = scmp.lt.s32.totalorder %s34, 3
        %s687 = scalar_select %p686, %s34, 3
        %s688 = scalar_lea.vmem %s16, %s687
      $region92: #{tpu_custom_call.1} parent=35 // pred_fallthru
        _
      // Predicated region
      $region93: #{tpu_custom_call.1} parent=35 // pred_check
        %p689 = pneg %p485
      $region94: #{tpu_custom_call.1} parent=35 // pred_check_branch
        %691 = sbr.rel (%p689) target = $region96
      $region95: #{tpu_custom_call.1} parent=35 // pred_region
        %p692 = scmp.lt.s32.totalorder %s34, 3
        %s693 = scalar_select %p692, %s34, 3
        %s694 = scalar_lea.vmem %s17, %s693
      $region96: #{tpu_custom_call.1} parent=35 // pred_fallthru
        _
    $region36: #{tpu_custom_call.1} parent=5 // pred_fallthru
      _
    %p695 = scmp.le.s32.totalorder 1, %s26
    %p696 = scmp.lt.s32.totalorder %s26, 9
    %p697 = pnand %p695, %p696
    %p698 = pneg %p697
    // Predicated region
    $region97: #{tpu_custom_call.1} parent=5 // pred_check
      _
    $region98: #{tpu_custom_call.1} parent=5 // pred_check_branch
      %700 = sbr.rel (%p697) target = $region100
    $region99: #{tpu_custom_call.1} parent=5 // pred_region
      %s701 = ssub.s32 %s26, 1
      %p702 = scmp.lt.s32.totalorder %s35, 1
      %s703 = scalar_select %p702, %s35, 1
      %s704 = smul.addr %s703, 10
      %s705 = smul.addr %s704, 8
      %s706 = scalar_lea.vmem %s0, %s705
      %p707 = pneg %p64
      %p708 = pneg %p61
      %p709 = pneg %p85
      %p710 = pneg %p82
      %p711 = pneg %p106
      %p712 = pneg %p103
      %p713 = pneg %p127
      %p714 = pneg %p124
      %p715 = scmp.lt.s32.totalorder %s36, 3
      %s716 = scalar_select %p715, %s36, 3
      %s717 = scalar_lea.vmem %s4, %s716
      %p718 = pneg %p153
      %p719 = pneg %p150
      %p720 = scmp.lt.s32.totalorder %s36, 3
      %s721 = scalar_select %p720, %s36, 3
      %s722 = scalar_lea.vmem %s5, %s721
      %p723 = pneg %p179
      %p724 = pneg %p176
      %p725 = scmp.lt.s32.totalorder %s36, 3
      %s726 = scalar_select %p725, %s36, 3
      %s727 = smul.addr %s726, 4
      %s728 = smul.addr %s727, 8
      %s729 = scalar_lea.vmem %s6, %s728
      %p730 = pneg %p205
      %p731 = pneg %p202
      %p732 = scmp.lt.s32.totalorder %s36, 3
      %s733 = scalar_select %p732, %s36, 3
      %s734 = scalar_lea.vmem %s7, %s733
      %p735 = pneg %p231
      %p736 = pneg %p228
      %p737 = scmp.lt.s32.totalorder %s36, 3
      %s738 = scalar_select %p737, %s36, 3
      %s739 = smul.addr %s738, 4
      %s740 = smul.addr %s739, 8
      %s741 = scalar_lea.vmem %s8, %s740
      %p742 = pneg %p257
      %p743 = pneg %p254
      %p744 = scmp.lt.s32.totalorder %s36, 3
      %s745 = scalar_select %p744, %s36, 3
      %s746 = scalar_lea.vmem %s9, %s745
      %p747 = pneg %p283
      %p748 = pneg %p280
      %p749 = scmp.lt.s32.totalorder %s36, 3
      %s750 = scalar_select %p749, %s36, 3
      %s751 = scalar_lea.vmem %s10, %s750
      %p752 = pneg %p309
      %p753 = pneg %p306
      %p754 = scmp.lt.s32.totalorder %s36, 3
      %s755 = scalar_select %p754, %s36, 3
      %s756 = scalar_lea.vmem %s11, %s755
      %p757 = pneg %p335
      %p758 = pneg %p332
      %p759 = scmp.lt.s32.totalorder %s36, 3
      %s760 = scalar_select %p759, %s36, 3
      %s761 = scalar_lea.vmem %s12, %s760
      %p762 = pneg %p361
      %p763 = pneg %p358
      %p764 = scmp.lt.s32.totalorder %s36, 3
      %s765 = scalar_select %p764, %s36, 3
      %s766 = smul.addr %s765, 4
      %s767 = smul.addr %s766, 8
      %s768 = scalar_lea.vmem %s13, %s767
      %p769 = pneg %p387
      %p770 = pneg %p384
      %p771 = scmp.lt.s32.totalorder %s36, 3
      %s772 = scalar_select %p771, %s36, 3
      %s773 = scalar_lea.vmem %s14, %s772
      %p774 = pneg %p413
      %p775 = pneg %p410
      %p776 = scmp.lt.s32.totalorder %s36, 3
      %s777 = scalar_select %p776, %s36, 3
      %s778 = smul.addr %s777, 16
      %s779 = smul.addr %s778, 8
      %s780 = scalar_lea.vmem %s15, %s779
      %p781 = pneg %p439
      %p782 = pneg %p436
      %p783 = scmp.lt.s32.totalorder %s36, 3
      %s784 = scalar_select %p783, %s36, 3
      %s785 = scalar_lea.vmem %s16, %s784
      %p786 = pneg %p465
      %p787 = pneg %p462
      %p788 = scmp.lt.s32.totalorder %s36, 3
      %s789 = scalar_select %p788, %s36, 3
      %s790 = scalar_lea.vmem %s17, %s789
      %p791 = pneg %p491
      %p792 = pneg %p488
      %p793 = pneg %p512
      %p794 = pneg %p509
      %p795 = pneg %p533
      %p796 = pneg %p530
      %p797 = pneg %p561
      %p798 = pneg %p558
      %p799 = scmp.lt.s32.totalorder %s36, 3
      %s800 = scalar_select %p799, %s36, 3
      %p801 = scmp.lt.s32.totalorder %s35, 1
      %s802 = scalar_select %p801, %s35, 1
      %s803 = smul.addr %s802, 4
      %s804 = smul.addr %s800, 8
      %s805 = sadd.s32 %s803, %s804
      %s806 = smul.addr %s805, 8
      %s807 = scalar_lea.vmem %s20, %s806
      %p808 = scmp.lt.s32.totalorder %s35, 1
      %s809 = scalar_select %p808, %s35, 1
      %s810 = smul.addr %s809, 10
      %s811 = smul.addr %s810, 8
      %s812 = scalar_lea.vmem %s0, %s811
      %p813 = scmp.lt.s32.totalorder %s36, 3
      %s814 = scalar_select %p813, %s36, 3
      %s815 = scalar_lea.vmem %s4, %s814
      %p816 = scmp.lt.s32.totalorder %s36, 3
      %s817 = scalar_select %p816, %s36, 3
      %s818 = scalar_lea.vmem %s5, %s817
      %p819 = scmp.lt.s32.totalorder %s36, 3
      %s820 = scalar_select %p819, %s36, 3
      %s821 = smul.addr %s820, 4
      %s822 = smul.addr %s821, 8
      %s823 = scalar_lea.vmem %s6, %s822
      %p824 = scmp.lt.s32.totalorder %s36, 3
      %s825 = scalar_select %p824, %s36, 3
      %s826 = scalar_lea.vmem %s7, %s825
      %p827 = scmp.lt.s32.totalorder %s36, 3
      %s828 = scalar_select %p827, %s36, 3
      %s829 = smul.addr %s828, 4
      %s830 = smul.addr %s829, 8
      %s831 = scalar_lea.vmem %s8, %s830
      %p832 = scmp.lt.s32.totalorder %s36, 3
      %s833 = scalar_select %p832, %s36, 3
      %s834 = scalar_lea.vmem %s9, %s833
      %p835 = scmp.lt.s32.totalorder %s36, 3
      %s836 = scalar_select %p835, %s36, 3
      %s837 = scalar_lea.vmem %s10, %s836
      %p838 = scmp.lt.s32.totalorder %s36, 3
      %s839 = scalar_select %p838, %s36, 3
      %s840 = scalar_lea.vmem %s11, %s839
      %p841 = scmp.lt.s32.totalorder %s36, 3
      %s842 = scalar_select %p841, %s36, 3
      %s843 = scalar_lea.vmem %s12, %s842
      %p844 = scmp.lt.s32.totalorder %s36, 3
      %s845 = scalar_select %p844, %s36, 3
      %s846 = smul.addr %s845, 4
      %s847 = smul.addr %s846, 8
      %s848 = scalar_lea.vmem %s13, %s847
      %p849 = scmp.lt.s32.totalorder %s36, 3
      %s850 = scalar_select %p849, %s36, 3
      %s851 = scalar_lea.vmem %s14, %s850
      %p852 = scmp.lt.s32.totalorder %s36, 3
      %s853 = scalar_select %p852, %s36, 3
      %s854 = smul.addr %s853, 16
      %s855 = smul.addr %s854, 8
      %s856 = scalar_lea.vmem %s15, %s855
      %p857 = scmp.lt.s32.totalorder %s36, 3
      %s858 = scalar_select %p857, %s36, 3
      %s859 = scalar_lea.vmem %s16, %s858
      %p860 = scmp.lt.s32.totalorder %s36, 3
      %s861 = scalar_select %p860, %s36, 3
      %s862 = scalar_lea.vmem %s17, %s861
      %p863 = scmp.lt.s32.totalorder %s36, 3
      %s864 = scalar_select %p863, %s36, 3
      %p865 = scmp.lt.s32.totalorder %s35, 1
      %s866 = scalar_select %p865, %s35, 1
      %s867 = smul.addr %s866, 4
      %s868 = smul.addr %s864, 8
      %s869 = sadd.s32 %s867, %s868
      %s870 = smul.addr %s869, 8
      %s871 = scalar_lea.vmem %s20, %s870
      %p872 = scmp.eq.s32.totalorder %s36, 0
      // Predicated region
      $region101: #{tpu_custom_call.1} parent=99 // pred_check
        %p873 = pneg %p872
      $region102: #{tpu_custom_call.1} parent=99 // pred_check_branch
        %875 = sbr.rel (%p873) target = $region104
      $region103: #{tpu_custom_call.1} parent=99 // pred_region
        %v876 = vld [vmem:[%s812] sm:$0xff]
        %v877 = vld [vmem:[%s812 + $0x8] sm:$0xff]
        %v878 = vld [vmem:[%s812 + $0x10] sm:$0xff]
        %v879 = vld [vmem:[%s812 + $0x18] sm:$0xff]
        %v880 = vld [vmem:[%s812 + $0x20] sm:$0xff]
        %v881 = vld [vmem:[%s812 + $0x28] sm:$0xff]
        %v882 = vld [vmem:[%s812 + $0x30] sm:$0xff]
        %v883 = vld [vmem:[%s812 + $0x38] sm:$0xff]
        %v884 = vld [vmem:[%s812 + $0x40] sm:$0xff]
        %v885 = vld [vmem:[%s812 + $0x48] sm:$0xff]
        %v886 = vld [vmem:[%s2] sm:$0xff]
        %v887 = vld [vmem:[%s2 + $0x8] sm:$0xff]
        %v888 = vld [vmem:[%s2 + $0x10] sm:$0xff]
        %v889 = vld [vmem:[%s2 + $0x18] sm:$0xff]
        %v890 = vld [vmem:[%s2 + $0x20] sm:$0xff]
        %v891 = vld [vmem:[%s2 + $0x28] sm:$0xff]
        %v892 = vld [vmem:[%s2 + $0x30] sm:$0xff]
        %v893 = vld [vmem:[%s2 + $0x38] sm:$0xff]
        %v894 = vld [vmem:[%s2 + $0x40] sm:$0xff]
        %v895 = vld [vmem:[%s2 + $0x48] sm:$0xff]
        %v896 = vld [vmem:[%s2 + $0x50] sm:$0xff]
        %v897 = vld [vmem:[%s2 + $0x58] sm:$0xff]
        %v898 = vld [vmem:[%s2 + $0x60] sm:$0xff]
        %v899 = vld [vmem:[%s2 + $0x68] sm:$0xff]
        %v900 = vld [vmem:[%s2 + $0x70] sm:$0xff]
        %v901 = vld [vmem:[%s2 + $0x78] sm:$0xff]
        %v902 = vld [vmem:[%s2 + $0x80] sm:$0xff]
        %v903 = vld [vmem:[%s2 + $0x88] sm:$0xff]
        %v904 = vld [vmem:[%s2 + $0x90] sm:$0xff]
        %v905 = vld [vmem:[%s2 + $0x98] sm:$0xff]
        %v906 = vld [vmem:[%s2 + $0xa0] sm:$0xff]
        %v907 = vld [vmem:[%s2 + $0xa8] sm:$0xff]
        %v908 = vld [vmem:[%s2 + $0xb0] sm:$0xff]
        %v909 = vld [vmem:[%s2 + $0xb8] sm:$0xff]
        %v910 = vld [vmem:[%s2 + $0xc0] sm:$0xff]
        %v911 = vld [vmem:[%s2 + $0xc8] sm:$0xff]
        %v912 = vld [vmem:[%s2 + $0xd0] sm:$0xff]
        %v913 = vld [vmem:[%s2 + $0xd8] sm:$0xff]
        %v914 = vld [vmem:[%s2 + $0xe0] sm:$0xff]
        %v915 = vld [vmem:[%s2 + $0xe8] sm:$0xff]
        %v916 = vld [vmem:[%s2 + $0xf0] sm:$0xff]
        %v917 = vld [vmem:[%s2 + $0xf8] sm:$0xff]
        %v918 = vld [vmem:[%s2 + $0x100] sm:$0xff]
        %v919 = vld [vmem:[%s2 + $0x108] sm:$0xff]
        %v920 = vld [vmem:[%s2 + $0x110] sm:$0xff]
        %v921 = vld [vmem:[%s2 + $0x118] sm:$0xff]
        %v922 = vld [vmem:[%s2 + $0x120] sm:$0xff]
        %v923 = vld [vmem:[%s2 + $0x128] sm:$0xff]
        %v924 = vld [vmem:[%s2 + $0x130] sm:$0xff]
        %v925 = vld [vmem:[%s2 + $0x138] sm:$0xff]
        %v926 = vld [vmem:[%s2 + $0x140] sm:$0xff]
        %v927 = vld [vmem:[%s2 + $0x148] sm:$0xff]
        %v928 = vld [vmem:[%s2 + $0x150] sm:$0xff]
        %v929 = vld [vmem:[%s2 + $0x158] sm:$0xff]
        %v930 = vld [vmem:[%s2 + $0x160] sm:$0xff]
        %v931 = vld [vmem:[%s2 + $0x168] sm:$0xff]
        %v932 = vld [vmem:[%s2 + $0x170] sm:$0xff]
        %v933 = vld [vmem:[%s2 + $0x178] sm:$0xff]
        %v934 = vld [vmem:[%s2 + $0x180] sm:$0xff]
        %v935 = vld [vmem:[%s2 + $0x188] sm:$0xff]
        %v936 = vld [vmem:[%s2 + $0x190] sm:$0xff]
        %v937 = vld [vmem:[%s2 + $0x198] sm:$0xff]
        %v938 = vld [vmem:[%s2 + $0x1a0] sm:$0xff]
        %v939 = vld [vmem:[%s2 + $0x1a8] sm:$0xff]
        %v940 = vld [vmem:[%s2 + $0x1b0] sm:$0xff]
        %v941 = vld [vmem:[%s2 + $0x1b8] sm:$0xff]
        %v942 = vld [vmem:[%s2 + $0x1c0] sm:$0xff]
        %v943 = vld [vmem:[%s2 + $0x1c8] sm:$0xff]
        %v944 = vld [vmem:[%s2 + $0x1d0] sm:$0xff]
        %v945 = vld [vmem:[%s2 + $0x1d8] sm:$0xff]
        %v946 = vld [vmem:[%s2 + $0x1e0] sm:$0xff]
        %v947 = vld [vmem:[%s2 + $0x1e8] sm:$0xff]
        %v948 = vld [vmem:[%s2 + $0x1f0] sm:$0xff]
        %v949 = vld [vmem:[%s2 + $0x1f8] sm:$0xff]
        %v950 = vld [vmem:[%s2 + $0x200] sm:$0xff]
        %v951 = vld [vmem:[%s2 + $0x208] sm:$0xff]
        %v952 = vld [vmem:[%s2 + $0x210] sm:$0xff]
        %v953 = vld [vmem:[%s2 + $0x218] sm:$0xff]
        %v954 = vld [vmem:[%s2 + $0x220] sm:$0xff]
        %v955 = vld [vmem:[%s2 + $0x228] sm:$0xff]
        %v956 = vld [vmem:[%s2 + $0x230] sm:$0xff]
        %v957 = vld [vmem:[%s2 + $0x238] sm:$0xff]
        %v958 = vld [vmem:[%s2 + $0x240] sm:$0xff]
        %v959 = vld [vmem:[%s2 + $0x248] sm:$0xf]
        %v960 = vld [vmem:[%s3] sm:$0x1]
        %v962 = vlaneseq
        %v963 = vshrl.u32 %v962, 7
        %v964 = vsub.s32 0, %v963
        %v965 = vrot.slane %v960, %v964
        %vm967 = vcmask 621568
        %v969 = vsel %vm967, %v880, 0
        %v972 = vsel %vm967, %v885, 0
        %vm974 = vcmask 1043456
        %v976 = vsel %vm974, %v959, 0
        %978 = vmatprep.subr.mxu0 0.0
        %979 = vmatpush1.msra.mxu0 %v901
        %980 = vmatprep.subr.mxu0 0.0
        %981 = vmatpush1.msra.mxu0 %v900
        %982 = vmatprep.subr.mxu0 0.0
        %983 = vmatpush1.msra.mxu0 %v899
        %984 = vmatprep.subr.mxu0 0.0
        %985 = vmatpush1.msra.mxu0 %v898
        %986 = vmatprep.subr.mxu0 0.0
        %987 = vmatpush1.msra.mxu0 %v897
        %988 = vmatprep.subr.mxu0 0.0
        %989 = vmatpush1.msra.mxu0 %v896
        %990 = vmatprep.subr.mxu0 0.0
        %991 = vmatpush1.msra.mxu0 %v895
        %992 = vmatprep.subr.mxu0 0.0
        %993 = vmatpush1.msra.mxu0 %v894
        %994 = vmatprep.subr.mxu0 0.0
        %995 = vmatpush1.msra.mxu0 %v893
        %996 = vmatprep.subr.mxu0 0.0
        %997 = vmatpush1.msra.mxu0 %v892
        %998 = vmatprep.subr.mxu0 0.0
        %999 = vmatpush1.msra.mxu0 %v891
        %1000 = vmatprep.subr.mxu0 0.0
        %1001 = vmatpush1.msra.mxu0 %v890
        %1002 = vmatprep.subr.mxu0 0.0
        %1003 = vmatpush1.msra.mxu0 %v889
        %1004 = vmatprep.subr.mxu0 0.0
        %1005 = vmatpush1.msra.mxu0 %v888
        %1006 = vmatprep.subr.mxu0 0.0
        %1007 = vmatpush1.msra.mxu0 %v887
        %1008 = vmatprep.subr.mxu0 0.0
        %1009 = vmatpush1.msra.mxu0 %v886
        %1010 = vmatprep.subr.mxu0 0.0
        %1011 = vmatpush2.msra.mxu0 %v917
        %1012 = vmatprep.subr.mxu0 0.0
        %1013 = vmatpush2.msra.mxu0 %v916
        %1014 = vmatprep.subr.mxu0 0.0
        %1015 = vmatpush2.msra.mxu0 %v915
        %1016 = vmatprep.subr.mxu0 0.0
        %1017 = vmatpush2.msra.mxu0 %v914
        %1018 = vmatprep.subr.mxu0 0.0
        %1019 = vmatpush2.msra.mxu0 %v913
        %1020 = vmatprep.subr.mxu0 0.0
        %1021 = vmatpush2.msra.mxu0 %v912
        %1022 = vmatprep.subr.mxu0 0.0
        %1023 = vmatpush2.msra.mxu0 %v911
        %1024 = vmatprep.subr.mxu0 0.0
        %1025 = vmatpush2.msra.mxu0 %v910
        %1026 = vmatprep.subr.mxu0 0.0
        %1027 = vmatpush2.msra.mxu0 %v909
        %1028 = vmatprep.subr.mxu0 0.0
        %1029 = vmatpush2.msra.mxu0 %v908
        %1030 = vmatprep.subr.mxu0 0.0
        %1031 = vmatpush2.msra.mxu0 %v907
        %1032 = vmatprep.subr.mxu0 0.0
        %1033 = vmatpush2.msra.mxu0 %v906
        %1034 = vmatprep.subr.mxu0 0.0
        %1035 = vmatpush2.msra.mxu0 %v905
        %1036 = vmatprep.subr.mxu0 0.0
        %1037 = vmatpush2.msra.mxu0 %v904
        %1038 = vmatprep.subr.mxu0 0.0
        %1039 = vmatpush2.msra.mxu0 %v903
        %1040 = vmatprep.subr.mxu0 0.0
        %1041 = vmatpush2.msra.mxu0 %v902
        %1042 = vmatprep.mubr.f32.mxu0 %v877
        %1043 = vmatmul.mubr.f32.gmra.mxu0 %v876
        %v1044 = vpop.f32.mrf.mxu0
        %v1045 = vadd.f32 %v965, %v1044
        %v1046 = vpop.f32.mrf.mxu0
        %1047 = vmatprep.mubr.f32.mxu0 %v882
        %1048 = vmatmul.mubr.f32.gmra.mxu0 %v881
        %v1049 = vpop.f32.mrf.mxu0
        %v1050 = vadd.f32 %v965, %v1049
        %v1051 = vpop.f32.mrf.mxu0
        %1052 = vdwg.mxu0
        %1053 = vmatprep.subr.mxu0 0.0
        %1054 = vmatpush1.msra.mxu0 %v933
        %1055 = vmatprep.subr.mxu0 0.0
        %1056 = vmatpush1.msra.mxu0 %v932
        %1057 = vmatprep.subr.mxu0 0.0
        %1058 = vmatpush1.msra.mxu0 %v931
        %1059 = vmatprep.subr.mxu0 0.0
        %1060 = vmatpush1.msra.mxu0 %v930
        %1061 = vmatprep.subr.mxu0 0.0
        %1062 = vmatpush1.msra.mxu0 %v929
        %1063 = vmatprep.subr.mxu0 0.0
        %1064 = vmatpush1.msra.mxu0 %v928
        %1065 = vmatprep.subr.mxu0 0.0
        %1066 = vmatpush1.msra.mxu0 %v927
        %1067 = vmatprep.subr.mxu0 0.0
        %1068 = vmatpush1.msra.mxu0 %v926
        %1069 = vmatprep.subr.mxu0 0.0
        %1070 = vmatpush1.msra.mxu0 %v925
        %1071 = vmatprep.subr.mxu0 0.0
        %1072 = vmatpush1.msra.mxu0 %v924
        %1073 = vmatprep.subr.mxu0 0.0
        %1074 = vmatpush1.msra.mxu0 %v923
        %1075 = vmatprep.subr.mxu0 0.0
        %1076 = vmatpush1.msra.mxu0 %v922
        %1077 = vmatprep.subr.mxu0 0.0
        %1078 = vmatpush1.msra.mxu0 %v921
        %1079 = vmatprep.subr.mxu0 0.0
        %1080 = vmatpush1.msra.mxu0 %v920
        %1081 = vmatprep.subr.mxu0 0.0
        %1082 = vmatpush1.msra.mxu0 %v919
        %1083 = vmatprep.subr.mxu0 0.0
        %1084 = vmatpush1.msra.mxu0 %v918
        %1085 = vmatprep.subr.mxu0 0.0
        %1086 = vmatpush2.msra.mxu0 %v949
        %1087 = vmatprep.subr.mxu0 0.0
        %1088 = vmatpush2.msra.mxu0 %v948
        %1089 = vmatprep.subr.mxu0 0.0
        %1090 = vmatpush2.msra.mxu0 %v947
        %1091 = vmatprep.subr.mxu0 0.0
        %1092 = vmatpush2.msra.mxu0 %v946
        %1093 = vmatprep.subr.mxu0 0.0
        %1094 = vmatpush2.msra.mxu0 %v945
        %1095 = vmatprep.subr.mxu0 0.0
        %1096 = vmatpush2.msra.mxu0 %v944
        %1097 = vmatprep.subr.mxu0 0.0
        %1098 = vmatpush2.msra.mxu0 %v943
        %1099 = vmatprep.subr.mxu0 0.0
        %1100 = vmatpush2.msra.mxu0 %v942
        %1101 = vmatprep.subr.mxu0 0.0
        %1102 = vmatpush2.msra.mxu0 %v941
        %1103 = vmatprep.subr.mxu0 0.0
        %1104 = vmatpush2.msra.mxu0 %v940
        %1105 = vmatprep.subr.mxu0 0.0
        %1106 = vmatpush2.msra.mxu0 %v939
        %1107 = vmatprep.subr.mxu0 0.0
        %1108 = vmatpush2.msra.mxu0 %v938
        %1109 = vmatprep.subr.mxu0 0.0
        %1110 = vmatpush2.msra.mxu0 %v937
        %1111 = vmatprep.subr.mxu0 0.0
        %1112 = vmatpush2.msra.mxu0 %v936
        %1113 = vmatprep.subr.mxu0 0.0
        %1114 = vmatpush2.msra.mxu0 %v935
        %1115 = vmatprep.subr.mxu0 0.0
        %1116 = vmatpush2.msra.mxu0 %v934
        %1117 = vmatprep.mubr.f32.mxu0 %v879
        %1118 = vmatmul.mubr.f32.gmra.mxu0 %v878
        %v1119 = vpop.f32.mrf.mxu0
        %v1120 = vadd.f32 %v1045, %v1119
        %v1121 = vpop.f32.mrf.mxu0
        %1122 = vmatprep.mubr.f32.mxu0 %v884
        %1123 = vmatmul.mubr.f32.gmra.mxu0 %v883
        %v1124 = vpop.f32.mrf.mxu0
        %v1125 = vadd.f32 %v1050, %v1124
        %v1126 = vpop.f32.mrf.mxu0
        %1127 = vdwg.mxu0
        %1128 = vmatprep.subr.mxu0 0.0
        %1129 = vmatpush1.msra.mxu0 0.0
        %1130 = vmatprep.subr.mxu0 0.0
        %1131 = vmatpush1.msra.mxu0 0.0
        %1132 = vmatprep.subr.mxu0 0.0
        %1133 = vmatpush1.msra.mxu0 0.0
        %1134 = vmatprep.subr.mxu0 0.0
        %1135 = vmatpush1.msra.mxu0 0.0
        %1136 = vmatprep.subr.mxu0 0.0
        %1137 = vmatpush1.msra.mxu0 0.0
        %1138 = vmatprep.subr.mxu0 0.0
        %1139 = vmatpush1.msra.mxu0 0.0
        %1140 = vmatprep.subr.mxu0 0.0
        %1141 = vmatpush1.msra.mxu0 %v976
        %1142 = vmatprep.subr.mxu0 0.0
        %1143 = vmatpush1.msra.mxu0 %v958
        %1144 = vmatprep.subr.mxu0 0.0
        %1145 = vmatpush1.msra.mxu0 %v957
        %1146 = vmatprep.subr.mxu0 0.0
        %1147 = vmatpush1.msra.mxu0 %v956
        %1148 = vmatprep.subr.mxu0 0.0
        %1149 = vmatpush1.msra.mxu0 %v955
        %1150 = vmatprep.subr.mxu0 0.0
        %1151 = vmatpush1.msra.mxu0 %v954
        %1152 = vmatprep.subr.mxu0 0.0
        %1153 = vmatpush1.msra.mxu0 %v953
        %1154 = vmatprep.subr.mxu0 0.0
        %1155 = vmatpush1.msra.mxu0 %v952
        %1156 = vmatprep.subr.mxu0 0.0
        %1157 = vmatpush1.msra.mxu0 %v951
        %1158 = vmatprep.subr.mxu0 0.0
        %1159 = vmatpush1.msra.mxu0 %v950
        %1160 = vmatprep.subr.mxu0 0.0
        %1161 = vmatpush2.msra.mxu0 0.0
        %1162 = vmatprep.subr.mxu0 0.0
        %1163 = vmatpush2.msra.mxu0 0.0
        %1164 = vmatprep.subr.mxu0 0.0
        %1165 = vmatpush2.msra.mxu0 0.0
        %1166 = vmatprep.subr.mxu0 0.0
        %1167 = vmatpush2.msra.mxu0 0.0
        %1168 = vmatprep.subr.mxu0 0.0
        %1169 = vmatpush2.msra.mxu0 0.0
        %1170 = vmatprep.subr.mxu0 0.0
        %1171 = vmatpush2.msra.mxu0 0.0
        %1172 = vmatprep.subr.mxu0 0.0
        %1173 = vmatpush2.msra.mxu0 0.0
        %1174 = vmatprep.subr.mxu0 0.0
        %1175 = vmatpush2.msra.mxu0 0.0
        %1176 = vmatprep.subr.mxu0 0.0
        %1177 = vmatpush2.msra.mxu0 0.0
        %1178 = vmatprep.subr.mxu0 0.0
        %1179 = vmatpush2.msra.mxu0 0.0
        %1180 = vmatprep.subr.mxu0 0.0
        %1181 = vmatpush2.msra.mxu0 0.0
        %1182 = vmatprep.subr.mxu0 0.0
        %1183 = vmatpush2.msra.mxu0 0.0
        %1184 = vmatprep.subr.mxu0 0.0
        %1185 = vmatpush2.msra.mxu0 0.0
        %1186 = vmatprep.subr.mxu0 0.0
        %1187 = vmatpush2.msra.mxu0 0.0
        %1188 = vmatprep.subr.mxu0 0.0
        %1189 = vmatpush2.msra.mxu0 0.0
        %1190 = vmatprep.subr.mxu0 0.0
        %1191 = vmatpush2.msra.mxu0 0.0
        %1192 = vmatprep.mubr.f32.mxu0 0.0
        %1193 = vmatmul.mubr.f32.gmra.mxu0 %v969
        %v1194 = vpop.f32.mrf.mxu0
        %v1195 = vadd.f32 %v1120, %v1194
        %v1196 = vpop.f32.mrf.mxu0
        %1197 = vmatprep.mubr.f32.mxu0 0.0
        %1198 = vmatmul.mubr.f32.gmra.mxu0 %v972
        %v1199 = vpop.f32.mrf.mxu0
        %v1200 = vadd.f32 %v1125, %v1199
        %v1201 = vpop.f32.mrf.mxu0
        %1202 = vdwg.mxu0
        %vm1205 = vcmask 1040384
        %v1206 = vrot.slane %v1195, 7
        %v1207 = vrot.slane %v1200, 7
        %v1208 = vsel %vm1205, %v1206, %v1207
        %v1212 = vsel %vm1205, 0.0, %v1206
        %v1213 = vld [vmem:[%s1] sm:$0xff]
        %v1214 = vld [vmem:[%s1 + $0x8] sm:$0xff]
        %v1215 = vld [vmem:[%s1 + $0x10] sm:$0x1]
        %v1216 = vadd.f32 %v1212, %v1213
        %v1217 = vadd.f32 %v1208, %v1214
        %v1218 = vadd.f32 %v1207, %v1215
        %vm1219 = vcmask 261120
        %1220 = vst.msk [vmem:[#allocation2] sm:$0xff] %vm1219, %v1216
        %1221 = vst.msk [vmem:[#allocation2 + $0x8] sm:$0xff] %vm1219, %v1217
        %vm1222 = vcmask 253952
        %1223 = vst.msk [vmem:[#allocation2 + $0x10] sm:$0x1] %vm1222, %v1218
      $region104: #{tpu_custom_call.1} parent=99 // pred_fallthru
        _
      %v1224 = vld [vmem:[#allocation2] sm:$0xff]
      %v1225 = vld [vmem:[#allocation2 + $0x8] sm:$0xff]
      %v1226 = vld [vmem:[#allocation2 + $0x10] sm:$0x1]
      %v1227 = vld [vmem:[%s815] sm:$0x1]
      %v1228 = vld [vmem:[%s818] sm:$0x1]
      %vm1229 = vcmask 261120
      %v1230 = vsel %vm1229, %v1224, 0.0
      %1231 = vadd.xlane.f32.xlu0 %v1230
      %v1232 = vpop.xlane.xlu0 %1231
      %v1233 = vsel %vm1229, %v1225, 0.0
      %1234 = vadd.xlane.f32.xlu0 %v1233
      %v1235 = vpop.xlane.xlu0 %1234
      %vm1236 = vcmask 253952
      %v1237 = vsel %vm1236, %v1226, 0.0
      %1238 = vadd.xlane.f32.xlu0 %v1237
      %v1239 = vpop.xlane.xlu0 %1238
      %v1240 = vrcp.pop 32.0
      %v1241 = vmul.f32 %v1232, %v1240
      %v1242 = vmul.f32 %v1235, %v1240
      %v1243 = vmul.f32 %v1239, %v1240
      %v1244 = vsub.f32 %v1224, %v1241
      %v1245 = vsub.f32 %v1225, %v1242
      %v1246 = vsub.f32 %v1226, %v1243
      %v1247 = vmul.f32 %v1244, %v1244
      %v1248 = vmul.f32 %v1245, %v1245
      %v1249 = vmul.f32 %v1246, %v1246
      %v1250 = vsel %vm1229, %v1247, 0.0
      %1251 = vadd.xlane.f32.xlu0 %v1250
      %v1252 = vpop.xlane.xlu0 %1251
      %v1253 = vsel %vm1229, %v1248, 0.0
      %1254 = vadd.xlane.f32.xlu0 %v1253
      %v1255 = vpop.xlane.xlu0 %1254
      %v1256 = vsel %vm1236, %v1249, 0.0
      %1257 = vadd.xlane.f32.xlu0 %v1256
      %v1258 = vpop.xlane.xlu0 %1257
      %v1259 = vmul.f32 %v1252, %v1240
      %v1260 = vmul.f32 %v1255, %v1240
      %v1261 = vmul.f32 %v1258, %v1240
      %v1262 = vadd.f32 %v1259, 1e-06
      %v1263 = vadd.f32 %v1260, 1e-06
      %v1264 = vadd.f32 %v1261, 1e-06
      %v1265 = vrsqrt.pop %v1262
      %v1266 = vrsqrt.pop %v1263
      %v1267 = vrsqrt.pop %v1264
      %v1268 = vmul.f32 %v1244, %v1265
      %v1269 = vmul.f32 %v1245, %v1266
      %v1270 = vmul.f32 %v1246, %v1267
      %v1272 = vlaneseq
      %v1273 = vshrl.u32 %v1272, 7
      %v1274 = vsub.s32 0, %v1273
      %v1275 = vrot.slane %v1227, %v1274
      %v1277 = vmul.f32 %v1268, %v1275
      %v1278 = vmul.f32 %v1269, %v1275
      %v1279 = vmul.f32 %v1270, %v1275
      %v1281 = vlaneseq
      %v1282 = vshrl.u32 %v1281, 7
      %v1283 = vsub.s32 0, %v1282
      %v1284 = vrot.slane %v1228, %v1283
      %v1286 = vadd.f32 %v1277, %v1284
      %v1287 = vadd.f32 %v1278, %v1284
      %v1288 = vadd.f32 %v1279, %v1284
      %v1289 = vld [vmem:[%s823] sm:$0xff]
      %v1290 = vld [vmem:[%s823 + $0x8] sm:$0xff]
      %v1291 = vld [vmem:[%s823 + $0x10] sm:$0xff]
      %v1292 = vld [vmem:[%s823 + $0x18] sm:$0xff]
      %v1293 = vld [vmem:[%s826] sm:$0x1]
      %v1295 = vlaneseq
      %v1296 = vshrl.u32 %v1295, 7
      %v1297 = vsub.s32 0, %v1296
      %v1298 = vrot.slane %v1293, %v1297
      %v1301 = vsel %vm1229, %v1286, 0
      %v1304 = vsel %vm1229, %v1287, 0
      %v1307 = vsel %vm1229, %v1288, 0
      %1309 = vmatprep.subr.mxu0 0.0
      %1310 = vmatpush1.msra.mxu0 0.0
      %1311 = vmatprep.subr.mxu0 0.0
      %1312 = vmatpush1.msra.mxu0 0.0
      %1313 = vmatprep.subr.mxu0 0.0
      %1314 = vmatpush1.msra.mxu0 0.0
      %1315 = vmatprep.subr.mxu0 0.0
      %1316 = vmatpush1.msra.mxu0 0.0
      %1317 = vmatprep.subr.mxu0 0.0
      %1318 = vmatpush1.msra.mxu0 0.0
      %1319 = vmatprep.subr.mxu0 0.0
      %1320 = vmatpush1.msra.mxu0 0.0
      %1321 = vmatprep.subr.mxu0 0.0
      %1322 = vmatpush1.msra.mxu0 0.0
      %1323 = vmatprep.subr.mxu0 0.0
      %1324 = vmatpush1.msra.mxu0 0.0
      %1325 = vmatprep.subr.mxu0 0.0
      %1326 = vmatpush1.msra.mxu0 0.0
      %1327 = vmatprep.subr.mxu0 0.0
      %1328 = vmatpush1.msra.mxu0 0.0
      %1329 = vmatprep.subr.mxu0 0.0
      %1330 = vmatpush1.msra.mxu0 0.0
      %1331 = vmatprep.subr.mxu0 0.0
      %1332 = vmatpush1.msra.mxu0 0.0
      %1333 = vmatprep.subr.mxu0 0.0
      %1334 = vmatpush1.msra.mxu0 %v1292
      %1335 = vmatprep.subr.mxu0 0.0
      %1336 = vmatpush1.msra.mxu0 %v1291
      %1337 = vmatprep.subr.mxu0 0.0
      %1338 = vmatpush1.msra.mxu0 %v1290
      %1339 = vmatprep.subr.mxu0 0.0
      %1340 = vmatpush1.msra.mxu0 %v1289
      %1341 = vmatprep.subr.mxu0 0.0
      %1342 = vmatpush2.msra.mxu0 0.0
      %1343 = vmatprep.subr.mxu0 0.0
      %1344 = vmatpush2.msra.mxu0 0.0
      %1345 = vmatprep.subr.mxu0 0.0
      %1346 = vmatpush2.msra.mxu0 0.0
      %1347 = vmatprep.subr.mxu0 0.0
      %1348 = vmatpush2.msra.mxu0 0.0
      %1349 = vmatprep.subr.mxu0 0.0
      %1350 = vmatpush2.msra.mxu0 0.0
      %1351 = vmatprep.subr.mxu0 0.0
      %1352 = vmatpush2.msra.mxu0 0.0
      %1353 = vmatprep.subr.mxu0 0.0
      %1354 = vmatpush2.msra.mxu0 0.0
      %1355 = vmatprep.subr.mxu0 0.0
      %1356 = vmatpush2.msra.mxu0 0.0
      %1357 = vmatprep.subr.mxu0 0.0
      %1358 = vmatpush2.msra.mxu0 0.0
      %1359 = vmatprep.subr.mxu0 0.0
      %1360 = vmatpush2.msra.mxu0 0.0
      %1361 = vmatprep.subr.mxu0 0.0
      %1362 = vmatpush2.msra.mxu0 0.0
      %1363 = vmatprep.subr.mxu0 0.0
      %1364 = vmatpush2.msra.mxu0 0.0
      %1365 = vmatprep.subr.mxu0 0.0
      %1366 = vmatpush2.msra.mxu0 0.0
      %1367 = vmatprep.subr.mxu0 0.0
      %1368 = vmatpush2.msra.mxu0 0.0
      %1369 = vmatprep.subr.mxu0 0.0
      %1370 = vmatpush2.msra.mxu0 0.0
      %1371 = vmatprep.subr.mxu0 0.0
      %1372 = vmatpush2.msra.mxu0 0.0
      %1373 = vmatprep.mubr.f32.mxu0 0.0
      %1374 = vmatmul.mubr.f32.gmra.mxu0 %v1301
      %v1375 = vpop.f32.mrf.mxu0
      %v1376 = vadd.f32 %v1298, %v1375
      %v1377 = vpop.f32.mrf.mxu0
      %1378 = vmatprep.mubr.f32.mxu0 0.0
      %1379 = vmatmul.mubr.f32.gmra.mxu0 %v1304
      %v1380 = vpop.f32.mrf.mxu0
      %v1381 = vadd.f32 %v1298, %v1380
      %v1382 = vpop.f32.mrf.mxu0
      %1383 = vmatprep.mubr.f32.mxu0 0.0
      %1384 = vmatmul.mubr.f32.gmra.mxu0 %v1307
      %v1385 = vpop.f32.mrf.mxu0
      %v1386 = vadd.f32 %v1298, %v1385
      %v1387 = vpop.f32.mrf.mxu0
      %1388 = vdwg.mxu0
      %1392 = vrot.lane.b32.xlu0 %v1376, 112
      %v1393 = vpop.permute.xlu0 %1392
      %1394 = vrot.lane.b32.xlu0 %v1381, 112
      %v1395 = vpop.permute.xlu0 %1394
      %1396 = vrot.lane.b32.xlu0 %v1386, 112
      %v1397 = vpop.permute.xlu0 %1396
      %v1401 = vmul.f32 %v1376, 0.25
      %v1402 = vmul.f32 %v1381, 0.25
      %v1403 = vmul.f32 %v1386, 0.25
      %v1404 = vmul.f32 %v1393, 0.25
      %v1405 = vmul.f32 %v1395, 0.25
      %v1406 = vmul.f32 %v1397, 0.25
      %1407 = vrot.lane.b32.xlu0 %v1376, 96
      %v1408 = vpop.permute.xlu0 %1407
      %1409 = vrot.lane.b32.xlu0 %v1381, 96
      %v1410 = vpop.permute.xlu0 %1409
      %1411 = vrot.lane.b32.xlu0 %v1386, 96
      %v1412 = vpop.permute.xlu0 %1411
      %vm1413 = vcmask 130048
      %v1415 = vsel %vm1413, %v1401, 0
      %v1418 = vsel %vm1413, %v1402, 0
      %v1421 = vsel %vm1413, %v1403, 0
      %v1423 = vsel %vm1413, %v1408, 0
      %v1425 = vsel %vm1413, %v1410, 0
      %v1427 = vsel %vm1413, %v1412, 0
      %1429 = vmatprep.subr.mxu0 0.0
      %1430 = vmatpush1.xpose.msra.mxu0 0.0
      %1431 = vmatprep.subr.mxu0 0.0
      %1432 = vmatpush1.xpose.msra.mxu0 0.0
      %1433 = vmatprep.subr.mxu0 0.0
      %1434 = vmatpush1.xpose.msra.mxu0 0.0
      %1435 = vmatprep.subr.mxu0 0.0
      %1436 = vmatpush1.xpose.msra.mxu0 0.0
      %1437 = vmatprep.subr.mxu0 0.0
      %1438 = vmatpush1.xpose.msra.mxu0 0.0
      %1439 = vmatprep.subr.mxu0 0.0
      %1440 = vmatpush1.xpose.msra.mxu0 0.0
      %1441 = vmatprep.subr.mxu0 0.0
      %1442 = vmatpush1.xpose.msra.mxu0 0.0
      %1443 = vmatprep.subr.mxu0 0.0
      %1444 = vmatpush1.xpose.msra.mxu0 0.0
      %1445 = vmatprep.subr.mxu0 0.0
      %1446 = vmatpush1.xpose.msra.mxu0 0.0
      %1447 = vmatprep.subr.mxu0 0.0
      %1448 = vmatpush1.xpose.msra.mxu0 0.0
      %1449 = vmatprep.subr.mxu0 0.0
      %1450 = vmatpush1.xpose.msra.mxu0 0.0
      %1451 = vmatprep.subr.mxu0 0.0
      %1452 = vmatpush1.xpose.msra.mxu0 0.0
      %1453 = vmatprep.subr.mxu0 0.0
      %1454 = vmatpush1.xpose.msra.mxu0 0.0
      %1455 = vmatprep.subr.mxu0 0.0
      %1456 = vmatpush1.xpose.msra.mxu0 %v1427
      %1457 = vmatprep.subr.mxu0 0.0
      %1458 = vmatpush1.xpose.msra.mxu0 %v1425
      %1459 = vmatprep.subr.mxu0 0.0
      %1460 = vmatpush1.xpose.msra.mxu0 %v1423
      %1461 = vmatprep.subr.mxu0 0.0
      %1462 = vmatpush2.xpose.msra.mxu0 0.0
      %1463 = vmatprep.subr.mxu0 0.0
      %1464 = vmatpush2.xpose.msra.mxu0 0.0
      %1465 = vmatprep.subr.mxu0 0.0
      %1466 = vmatpush2.xpose.msra.mxu0 0.0
      %1467 = vmatprep.subr.mxu0 0.0
      %1468 = vmatpush2.xpose.msra.mxu0 0.0
      %1469 = vmatprep.subr.mxu0 0.0
      %1470 = vmatpush2.xpose.msra.mxu0 0.0
      %1471 = vmatprep.subr.mxu0 0.0
      %1472 = vmatpush2.xpose.msra.mxu0 0.0
      %1473 = vmatprep.subr.mxu0 0.0
      %1474 = vmatpush2.xpose.msra.mxu0 0.0
      %1475 = vmatprep.subr.mxu0 0.0
      %1476 = vmatpush2.xpose.msra.mxu0 0.0
      %1477 = vmatprep.subr.mxu0 0.0
      %1478 = vmatpush2.xpose.msra.mxu0 0.0
      %1479 = vmatprep.subr.mxu0 0.0
      %1480 = vmatpush2.xpose.msra.mxu0 0.0
      %1481 = vmatprep.subr.mxu0 0.0
      %1482 = vmatpush2.xpose.msra.mxu0 0.0
      %1483 = vmatprep.subr.mxu0 0.0
      %1484 = vmatpush2.xpose.msra.mxu0 0.0
      %1485 = vmatprep.subr.mxu0 0.0
      %1486 = vmatpush2.xpose.msra.mxu0 0.0
      %1487 = vmatprep.subr.mxu0 0.0
      %1488 = vmatpush2.xpose.msra.mxu0 0.0
      %1489 = vmatprep.subr.mxu0 0.0
      %1490 = vmatpush2.xpose.msra.mxu0 0.0
      %1491 = vmatprep.subr.mxu0 0.0
      %1492 = vmatpush2.xpose.msra.mxu0 0.0
      %1493 = vmatprep.mubr.f32.mxu0 0.0
      %1494 = vmatmul.mubr.f32.gmra.mxu0 %v1415
      %v1495 = vpop.f32.mrf.mxu0
      %v1496 = vadd.f32 0.0, %v1495
      %v1497 = vpop.f32.mrf.mxu0
      %1498 = vmatprep.mubr.f32.mxu0 0.0
      %1499 = vmatmul.mubr.f32.gmra.mxu0 %v1418
      %v1500 = vpop.f32.mrf.mxu0
      %v1501 = vadd.f32 0.0, %v1500
      %v1502 = vpop.f32.mrf.mxu0
      %1503 = vmatprep.mubr.f32.mxu0 0.0
      %1504 = vmatmul.mubr.f32.gmra.mxu0 %v1421
      %v1505 = vpop.f32.mrf.mxu0
      %v1506 = vadd.f32 0.0, %v1505
      %v1507 = vpop.f32.mrf.mxu0
      %1508 = vdwg.mxu0
      %1509 = vrot.lane.b32.xlu0 %v1393, 96
      %v1510 = vpop.permute.xlu0 %1509
      %1511 = vrot.lane.b32.xlu0 %v1395, 96
      %v1512 = vpop.permute.xlu0 %1511
      %1513 = vrot.lane.b32.xlu0 %v1397, 96
      %v1514 = vpop.permute.xlu0 %1513
      %v1516 = vsel %vm1413, %v1404, 0
      %v1519 = vsel %vm1413, %v1405, 0
      %v1522 = vsel %vm1413, %v1406, 0
      %v1524 = vsel %vm1413, %v1510, 0
      %v1526 = vsel %vm1413, %v1512, 0
      %v1528 = vsel %vm1413, %v1514, 0
      %1530 = vmatprep.subr.mxu0 0.0
      %1531 = vmatpush1.xpose.msra.mxu0 0.0
      %1532 = vmatprep.subr.mxu0 0.0
      %1533 = vmatpush1.xpose.msra.mxu0 0.0
      %1534 = vmatprep.subr.mxu0 0.0
      %1535 = vmatpush1.xpose.msra.mxu0 0.0
      %1536 = vmatprep.subr.mxu0 0.0
      %1537 = vmatpush1.xpose.msra.mxu0 0.0
      %1538 = vmatprep.subr.mxu0 0.0
      %1539 = vmatpush1.xpose.msra.mxu0 0.0
      %1540 = vmatprep.subr.mxu0 0.0
      %1541 = vmatpush1.xpose.msra.mxu0 0.0
      %1542 = vmatprep.subr.mxu0 0.0
      %1543 = vmatpush1.xpose.msra.mxu0 0.0
      %1544 = vmatprep.subr.mxu0 0.0
      %1545 = vmatpush1.xpose.msra.mxu0 0.0
      %1546 = vmatprep.subr.mxu0 0.0
      %1547 = vmatpush1.xpose.msra.mxu0 0.0
      %1548 = vmatprep.subr.mxu0 0.0
      %1549 = vmatpush1.xpose.msra.mxu0 0.0
      %1550 = vmatprep.subr.mxu0 0.0
      %1551 = vmatpush1.xpose.msra.mxu0 0.0
      %1552 = vmatprep.subr.mxu0 0.0
      %1553 = vmatpush1.xpose.msra.mxu0 0.0
      %1554 = vmatprep.subr.mxu0 0.0
      %1555 = vmatpush1.xpose.msra.mxu0 0.0
      %1556 = vmatprep.subr.mxu0 0.0
      %1557 = vmatpush1.xpose.msra.mxu0 %v1528
      %1558 = vmatprep.subr.mxu0 0.0
      %1559 = vmatpush1.xpose.msra.mxu0 %v1526
      %1560 = vmatprep.subr.mxu0 0.0
      %1561 = vmatpush1.xpose.msra.mxu0 %v1524
      %1562 = vmatprep.subr.mxu0 0.0
      %1563 = vmatpush2.xpose.msra.mxu0 0.0
      %1564 = vmatprep.subr.mxu0 0.0
      %1565 = vmatpush2.xpose.msra.mxu0 0.0
      %1566 = vmatprep.subr.mxu0 0.0
      %1567 = vmatpush2.xpose.msra.mxu0 0.0
      %1568 = vmatprep.subr.mxu0 0.0
      %1569 = vmatpush2.xpose.msra.mxu0 0.0
      %1570 = vmatprep.subr.mxu0 0.0
      %1571 = vmatpush2.xpose.msra.mxu0 0.0
      %1572 = vmatprep.subr.mxu0 0.0
      %1573 = vmatpush2.xpose.msra.mxu0 0.0
      %1574 = vmatprep.subr.mxu0 0.0
      %1575 = vmatpush2.xpose.msra.mxu0 0.0
      %1576 = vmatprep.subr.mxu0 0.0
      %1577 = vmatpush2.xpose.msra.mxu0 0.0
      %1578 = vmatprep.subr.mxu0 0.0
      %1579 = vmatpush2.xpose.msra.mxu0 0.0
      %1580 = vmatprep.subr.mxu0 0.0
      %1581 = vmatpush2.xpose.msra.mxu0 0.0
      %1582 = vmatprep.subr.mxu0 0.0
      %1583 = vmatpush2.xpose.msra.mxu0 0.0
      %1584 = vmatprep.subr.mxu0 0.0
      %1585 = vmatpush2.xpose.msra.mxu0 0.0
      %1586 = vmatprep.subr.mxu0 0.0
      %1587 = vmatpush2.xpose.msra.mxu0 0.0
      %1588 = vmatprep.subr.mxu0 0.0
      %1589 = vmatpush2.xpose.msra.mxu0 0.0
      %1590 = vmatprep.subr.mxu0 0.0
      %1591 = vmatpush2.xpose.msra.mxu0 0.0
      %1592 = vmatprep.subr.mxu0 0.0
      %1593 = vmatpush2.xpose.msra.mxu0 0.0
      %1594 = vmatprep.mubr.f32.mxu0 0.0
      %1595 = vmatmul.mubr.f32.gmra.mxu0 %v1516
      %v1596 = vpop.f32.mrf.mxu0
      %v1597 = vadd.f32 0.0, %v1596
      %v1598 = vpop.f32.mrf.mxu0
      %1599 = vmatprep.mubr.f32.mxu0 0.0
      %1600 = vmatmul.mubr.f32.gmra.mxu0 %v1519
      %v1601 = vpop.f32.mrf.mxu0
      %v1602 = vadd.f32 0.0, %v1601
      %v1603 = vpop.f32.mrf.mxu0
      %1604 = vmatprep.mubr.f32.mxu0 0.0
      %1605 = vmatmul.mubr.f32.gmra.mxu0 %v1522
      %v1606 = vpop.f32.mrf.mxu0
      %v1607 = vadd.f32 0.0, %v1606
      %v1608 = vpop.f32.mrf.mxu0
      %1609 = vdwg.mxu0
      %vm1610 = vcmask 138240
      %v1611 = vsel %vm1610, %v1496, -inf
      %1612 = vmax.xlane.f32.xlu0 %v1611
      %v1613 = vpop.xlane.xlu0 %1612
      %v1614 = vsel %vm1610, %v1501, -inf
      %1615 = vmax.xlane.f32.xlu0 %v1614
      %v1616 = vpop.xlane.xlu0 %1615
      %vm1617 = vcmask 131072
      %v1618 = vsel %vm1617, %v1506, -inf
      %1619 = vmax.xlane.f32.xlu0 %v1618
      %v1620 = vpop.xlane.xlu0 %1619
      %v1621 = vsel %vm1610, %v1597, -inf
      %1622 = vmax.xlane.f32.xlu0 %v1621
      %v1623 = vpop.xlane.xlu0 %1622
      %v1624 = vsel %vm1610, %v1602, -inf
      %1625 = vmax.xlane.f32.xlu0 %v1624
      %v1626 = vpop.xlane.xlu0 %1625
      %v1627 = vsel %vm1617, %v1607, -inf
      %1628 = vmax.xlane.f32.xlu0 %v1627
      %v1629 = vpop.xlane.xlu0 %1628
      %v1630 = vsub.f32 %v1496, %v1613
      %v1631 = vsub.f32 %v1501, %v1616
      %v1632 = vsub.f32 %v1506, %v1620
      %v1633 = vsub.f32 %v1597, %v1623
      %v1634 = vsub.f32 %v1602, %v1626
      %v1635 = vsub.f32 %v1607, %v1629
      %v1636 = vmul.f32 %v1630, 1.442695
      %v1637 = vpow.pop %v1636
      %v1638 = vmul.f32 %v1631, 1.442695
      %v1639 = vpow.pop %v1638
      %v1640 = vmul.f32 %v1632, 1.442695
      %v1641 = vpow.pop %v1640
      %v1642 = vmul.f32 %v1633, 1.442695
      %v1643 = vpow.pop %v1642
      %v1644 = vmul.f32 %v1634, 1.442695
      %v1645 = vpow.pop %v1644
      %v1646 = vmul.f32 %v1635, 1.442695
      %v1647 = vpow.pop %v1646
      %v1648 = vsel %vm1610, %v1637, 0.0
      %1649 = vadd.xlane.f32.xlu0 %v1648
      %v1650 = vpop.xlane.xlu0 %1649
      %v1651 = vsel %vm1610, %v1639, 0.0
      %1652 = vadd.xlane.f32.xlu0 %v1651
      %v1653 = vpop.xlane.xlu0 %1652
      %v1654 = vsel %vm1617, %v1641, 0.0
      %1655 = vadd.xlane.f32.xlu0 %v1654
      %v1656 = vpop.xlane.xlu0 %1655
      %v1657 = vsel %vm1610, %v1643, 0.0
      %1658 = vadd.xlane.f32.xlu0 %v1657
      %v1659 = vpop.xlane.xlu0 %1658
      %v1660 = vsel %vm1610, %v1645, 0.0
      %1661 = vadd.xlane.f32.xlu0 %v1660
      %v1662 = vpop.xlane.xlu0 %1661
      %v1663 = vsel %vm1617, %v1647, 0.0
      %1664 = vadd.xlane.f32.xlu0 %v1663
      %v1665 = vpop.xlane.xlu0 %1664
      %v1666 = vrcp.pop %v1650
      %v1667 = vrcp.pop %v1653
      %v1668 = vrcp.pop %v1656
      %v1669 = vrcp.pop %v1659
      %v1670 = vrcp.pop %v1662
      %v1671 = vrcp.pop %v1665
      %v1672 = vmul.f32 %v1637, %v1666
      %v1673 = vmul.f32 %v1639, %v1667
      %v1674 = vmul.f32 %v1641, %v1668
      %v1675 = vmul.f32 %v1643, %v1669
      %v1676 = vmul.f32 %v1645, %v1670
      %v1677 = vmul.f32 %v1647, %v1671
      %1678 = vrot.lane.b32.xlu0 %v1376, 64
      %v1679 = vpop.permute.xlu0 %1678
      %1680 = vrot.lane.b32.xlu0 %v1381, 64
      %v1681 = vpop.permute.xlu0 %1680
      %1682 = vrot.lane.b32.xlu0 %v1386, 64
      %v1683 = vpop.permute.xlu0 %1682
      %v1687 = vsel %vm1610, %v1672, 0
      %v1690 = vsel %vm1610, %v1673, 0
      %v1693 = vsel %vm1610, %v1674, 0
      %vm1695 = vcmask 1040384
      %v1696 = vsel %vm1695, %v1683, 0
      %1698 = vmatprep.subr.mxu0 0.0
      %1699 = vmatpush1.msra.mxu0 0.0
      %1700 = vmatprep.subr.mxu0 0.0
      %1701 = vmatpush1.msra.mxu0 0.0
      %1702 = vmatprep.subr.mxu0 0.0
      %1703 = vmatpush1.msra.mxu0 0.0
      %1704 = vmatprep.subr.mxu0 0.0
      %1705 = vmatpush1.msra.mxu0 0.0
      %1706 = vmatprep.subr.mxu0 0.0
      %1707 = vmatpush1.msra.mxu0 0.0
      %1708 = vmatprep.subr.mxu0 0.0
      %1709 = vmatpush1.msra.mxu0 0.0
      %1710 = vmatprep.subr.mxu0 0.0
      %1711 = vmatpush1.msra.mxu0 0.0
      %1712 = vmatprep.subr.mxu0 0.0
      %1713 = vmatpush1.msra.mxu0 0.0
      %1714 = vmatprep.subr.mxu0 0.0
      %1715 = vmatpush1.msra.mxu0 0.0
      %1716 = vmatprep.subr.mxu0 0.0
      %1717 = vmatpush1.msra.mxu0 0.0
      %1718 = vmatprep.subr.mxu0 0.0
      %1719 = vmatpush1.msra.mxu0 0.0
      %1720 = vmatprep.subr.mxu0 0.0
      %1721 = vmatpush1.msra.mxu0 0.0
      %1722 = vmatprep.subr.mxu0 0.0
      %1723 = vmatpush1.msra.mxu0 0.0
      %1724 = vmatprep.subr.mxu0 0.0
      %1725 = vmatpush1.msra.mxu0 %v1696
      %1726 = vmatprep.subr.mxu0 0.0
      %1727 = vmatpush1.msra.mxu0 %v1681
      %1728 = vmatprep.subr.mxu0 0.0
      %1729 = vmatpush1.msra.mxu0 %v1679
      %1730 = vmatprep.subr.mxu0 0.0
      %1731 = vmatpush2.msra.mxu0 0.0
      %1732 = vmatprep.subr.mxu0 0.0
      %1733 = vmatpush2.msra.mxu0 0.0
      %1734 = vmatprep.subr.mxu0 0.0
      %1735 = vmatpush2.msra.mxu0 0.0
      %1736 = vmatprep.subr.mxu0 0.0
      %1737 = vmatpush2.msra.mxu0 0.0
      %1738 = vmatprep.subr.mxu0 0.0
      %1739 = vmatpush2.msra.mxu0 0.0
      %1740 = vmatprep.subr.mxu0 0.0
      %1741 = vmatpush2.msra.mxu0 0.0
      %1742 = vmatprep.subr.mxu0 0.0
      %1743 = vmatpush2.msra.mxu0 0.0
      %1744 = vmatprep.subr.mxu0 0.0
      %1745 = vmatpush2.msra.mxu0 0.0
      %1746 = vmatprep.subr.mxu0 0.0
      %1747 = vmatpush2.msra.mxu0 0.0
      %1748 = vmatprep.subr.mxu0 0.0
      %1749 = vmatpush2.msra.mxu0 0.0
      %1750 = vmatprep.subr.mxu0 0.0
      %1751 = vmatpush2.msra.mxu0 0.0
      %1752 = vmatprep.subr.mxu0 0.0
      %1753 = vmatpush2.msra.mxu0 0.0
      %1754 = vmatprep.subr.mxu0 0.0
      %1755 = vmatpush2.msra.mxu0 0.0
      %1756 = vmatprep.subr.mxu0 0.0
      %1757 = vmatpush2.msra.mxu0 0.0
      %1758 = vmatprep.subr.mxu0 0.0
      %1759 = vmatpush2.msra.mxu0 0.0
      %1760 = vmatprep.subr.mxu0 0.0
      %1761 = vmatpush2.msra.mxu0 0.0
      %1762 = vmatprep.mubr.f32.mxu0 0.0
      %1763 = vmatmul.mubr.f32.gmra.mxu0 %v1687
      %v1764 = vpop.f32.mrf.mxu0
      %v1765 = vadd.f32 0.0, %v1764
      %v1766 = vpop.f32.mrf.mxu0
      %1767 = vmatprep.mubr.f32.mxu0 0.0
      %1768 = vmatmul.mubr.f32.gmra.mxu0 %v1690
      %v1769 = vpop.f32.mrf.mxu0
      %v1770 = vadd.f32 0.0, %v1769
      %v1771 = vpop.f32.mrf.mxu0
      %1772 = vmatprep.mubr.f32.mxu0 0.0
      %1773 = vmatmul.mubr.f32.gmra.mxu0 %v1693
      %v1774 = vpop.f32.mrf.mxu0
      %v1775 = vadd.f32 0.0, %v1774
      %v1776 = vpop.f32.mrf.mxu0
      %1777 = vdwg.mxu0
      %1778 = vrot.lane.b32.xlu0 %v1393, 64
      %v1779 = vpop.permute.xlu0 %1778
      %1780 = vrot.lane.b32.xlu0 %v1395, 64
      %v1781 = vpop.permute.xlu0 %1780
      %1782 = vrot.lane.b32.xlu0 %v1397, 64
      %v1783 = vpop.permute.xlu0 %1782
      %v1787 = vsel %vm1610, %v1675, 0
      %v1790 = vsel %vm1610, %v1676, 0
      %v1793 = vsel %vm1610, %v1677, 0
      %v1795 = vsel %vm1695, %v1783, 0
      %1797 = vmatprep.subr.mxu0 0.0
      %1798 = vmatpush1.msra.mxu0 0.0
      %1799 = vmatprep.subr.mxu0 0.0
      %1800 = vmatpush1.msra.mxu0 0.0
      %1801 = vmatprep.subr.mxu0 0.0
      %1802 = vmatpush1.msra.mxu0 0.0
      %1803 = vmatprep.subr.mxu0 0.0
      %1804 = vmatpush1.msra.mxu0 0.0
      %1805 = vmatprep.subr.mxu0 0.0
      %1806 = vmatpush1.msra.mxu0 0.0
      %1807 = vmatprep.subr.mxu0 0.0
      %1808 = vmatpush1.msra.mxu0 0.0
      %1809 = vmatprep.subr.mxu0 0.0
      %1810 = vmatpush1.msra.mxu0 0.0
      %1811 = vmatprep.subr.mxu0 0.0
      %1812 = vmatpush1.msra.mxu0 0.0
      %1813 = vmatprep.subr.mxu0 0.0
      %1814 = vmatpush1.msra.mxu0 0.0
      %1815 = vmatprep.subr.mxu0 0.0
      %1816 = vmatpush1.msra.mxu0 0.0
      %1817 = vmatprep.subr.mxu0 0.0
      %1818 = vmatpush1.msra.mxu0 0.0
      %1819 = vmatprep.subr.mxu0 0.0
      %1820 = vmatpush1.msra.mxu0 0.0
      %1821 = vmatprep.subr.mxu0 0.0
      %1822 = vmatpush1.msra.mxu0 0.0
      %1823 = vmatprep.subr.mxu0 0.0
      %1824 = vmatpush1.msra.mxu0 %v1795
      %1825 = vmatprep.subr.mxu0 0.0
      %1826 = vmatpush1.msra.mxu0 %v1781
      %1827 = vmatprep.subr.mxu0 0.0
      %1828 = vmatpush1.msra.mxu0 %v1779
      %1829 = vmatprep.subr.mxu0 0.0
      %1830 = vmatpush2.msra.mxu0 0.0
      %1831 = vmatprep.subr.mxu0 0.0
      %1832 = vmatpush2.msra.mxu0 0.0
      %1833 = vmatprep.subr.mxu0 0.0
      %1834 = vmatpush2.msra.mxu0 0.0
      %1835 = vmatprep.subr.mxu0 0.0
      %1836 = vmatpush2.msra.mxu0 0.0
      %1837 = vmatprep.subr.mxu0 0.0
      %1838 = vmatpush2.msra.mxu0 0.0
      %1839 = vmatprep.subr.mxu0 0.0
      %1840 = vmatpush2.msra.mxu0 0.0
      %1841 = vmatprep.subr.mxu0 0.0
      %1842 = vmatpush2.msra.mxu0 0.0
      %1843 = vmatprep.subr.mxu0 0.0
      %1844 = vmatpush2.msra.mxu0 0.0
      %1845 = vmatprep.subr.mxu0 0.0
      %1846 = vmatpush2.msra.mxu0 0.0
      %1847 = vmatprep.subr.mxu0 0.0
      %1848 = vmatpush2.msra.mxu0 0.0
      %1849 = vmatprep.subr.mxu0 0.0
      %1850 = vmatpush2.msra.mxu0 0.0
      %1851 = vmatprep.subr.mxu0 0.0
      %1852 = vmatpush2.msra.mxu0 0.0
      %1853 = vmatprep.subr.mxu0 0.0
      %1854 = vmatpush2.msra.mxu0 0.0
      %1855 = vmatprep.subr.mxu0 0.0
      %1856 = vmatpush2.msra.mxu0 0.0
      %1857 = vmatprep.subr.mxu0 0.0
      %1858 = vmatpush2.msra.mxu0 0.0
      %1859 = vmatprep.subr.mxu0 0.0
      %1860 = vmatpush2.msra.mxu0 0.0
      %1861 = vmatprep.mubr.f32.mxu0 0.0
      %1862 = vmatmul.mubr.f32.gmra.mxu0 %v1787
      %v1863 = vpop.f32.mrf.mxu0
      %v1864 = vadd.f32 0.0, %v1863
      %v1865 = vpop.f32.mrf.mxu0
      %1866 = vmatprep.mubr.f32.mxu0 0.0
      %1867 = vmatmul.mubr.f32.gmra.mxu0 %v1790
      %v1868 = vpop.f32.mrf.mxu0
      %v1869 = vadd.f32 0.0, %v1868
      %v1870 = vpop.f32.mrf.mxu0
      %1871 = vmatprep.mubr.f32.mxu0 0.0
      %1872 = vmatmul.mubr.f32.gmra.mxu0 %v1793
      %v1873 = vpop.f32.mrf.mxu0
      %v1874 = vadd.f32 0.0, %v1873
      %v1875 = vpop.f32.mrf.mxu0
      %1876 = vdwg.mxu0
      %1880 = vrot.lane.b32.xlu0 %v1864, 16
      %v1881 = vpop.permute.xlu0 %1880
      %1882 = vrot.lane.b32.xlu0 %v1869, 16
      %v1883 = vpop.permute.xlu0 %1882
      %1884 = vrot.lane.b32.xlu0 %v1874, 16
      %v1885 = vpop.permute.xlu0 %1884
      %v1889 = vsel %vm1413, %v1765, %v1881
      %v1890 = vsel %vm1413, %v1770, %v1883
      %v1891 = vsel %vm1413, %v1775, %v1885
      %v1892 = vld [vmem:[%s831] sm:$0xff]
      %v1893 = vld [vmem:[%s831 + $0x8] sm:$0xff]
      %v1894 = vld [vmem:[%s831 + $0x10] sm:$0xff]
      %v1895 = vld [vmem:[%s831 + $0x18] sm:$0xff]
      %v1896 = vld [vmem:[%s834] sm:$0x1]
      %v1898 = vlaneseq
      %v1899 = vshrl.u32 %v1898, 7
      %v1900 = vsub.s32 0, %v1899
      %v1901 = vrot.slane %v1896, %v1900
      %v1904 = vsel %vm1229, %v1889, 0
      %v1907 = vsel %vm1229, %v1890, 0
      %v1910 = vsel %vm1229, %v1891, 0
      %1912 = vmatprep.subr.mxu0 0.0
      %1913 = vmatpush1.msra.mxu0 0.0
      %1914 = vmatprep.subr.mxu0 0.0
      %1915 = vmatpush1.msra.mxu0 0.0
      %1916 = vmatprep.subr.mxu0 0.0
      %1917 = vmatpush1.msra.mxu0 0.0
      %1918 = vmatprep.subr.mxu0 0.0
      %1919 = vmatpush1.msra.mxu0 0.0
      %1920 = vmatprep.subr.mxu0 0.0
      %1921 = vmatpush1.msra.mxu0 0.0
      %1922 = vmatprep.subr.mxu0 0.0
      %1923 = vmatpush1.msra.mxu0 0.0
      %1924 = vmatprep.subr.mxu0 0.0
      %1925 = vmatpush1.msra.mxu0 0.0
      %1926 = vmatprep.subr.mxu0 0.0
      %1927 = vmatpush1.msra.mxu0 0.0
      %1928 = vmatprep.subr.mxu0 0.0
      %1929 = vmatpush1.msra.mxu0 0.0
      %1930 = vmatprep.subr.mxu0 0.0
      %1931 = vmatpush1.msra.mxu0 0.0
      %1932 = vmatprep.subr.mxu0 0.0
      %1933 = vmatpush1.msra.mxu0 0.0
      %1934 = vmatprep.subr.mxu0 0.0
      %1935 = vmatpush1.msra.mxu0 0.0
      %1936 = vmatprep.subr.mxu0 0.0
      %1937 = vmatpush1.msra.mxu0 %v1895
      %1938 = vmatprep.subr.mxu0 0.0
      %1939 = vmatpush1.msra.mxu0 %v1894
      %1940 = vmatprep.subr.mxu0 0.0
      %1941 = vmatpush1.msra.mxu0 %v1893
      %1942 = vmatprep.subr.mxu0 0.0
      %1943 = vmatpush1.msra.mxu0 %v1892
      %1944 = vmatprep.subr.mxu0 0.0
      %1945 = vmatpush2.msra.mxu0 0.0
      %1946 = vmatprep.subr.mxu0 0.0
      %1947 = vmatpush2.msra.mxu0 0.0
      %1948 = vmatprep.subr.mxu0 0.0
      %1949 = vmatpush2.msra.mxu0 0.0
      %1950 = vmatprep.subr.mxu0 0.0
      %1951 = vmatpush2.msra.mxu0 0.0
      %1952 = vmatprep.subr.mxu0 0.0
      %1953 = vmatpush2.msra.mxu0 0.0
      %1954 = vmatprep.subr.mxu0 0.0
      %1955 = vmatpush2.msra.mxu0 0.0
      %1956 = vmatprep.subr.mxu0 0.0
      %1957 = vmatpush2.msra.mxu0 0.0
      %1958 = vmatprep.subr.mxu0 0.0
      %1959 = vmatpush2.msra.mxu0 0.0
      %1960 = vmatprep.subr.mxu0 0.0
      %1961 = vmatpush2.msra.mxu0 0.0
      %1962 = vmatprep.subr.mxu0 0.0
      %1963 = vmatpush2.msra.mxu0 0.0
      %1964 = vmatprep.subr.mxu0 0.0
      %1965 = vmatpush2.msra.mxu0 0.0
      %1966 = vmatprep.subr.mxu0 0.0
      %1967 = vmatpush2.msra.mxu0 0.0
      %1968 = vmatprep.subr.mxu0 0.0
      %1969 = vmatpush2.msra.mxu0 0.0
      %1970 = vmatprep.subr.mxu0 0.0
      %1971 = vmatpush2.msra.mxu0 0.0
      %1972 = vmatprep.subr.mxu0 0.0
      %1973 = vmatpush2.msra.mxu0 0.0
      %1974 = vmatprep.subr.mxu0 0.0
      %1975 = vmatpush2.msra.mxu0 0.0
      %1976 = vmatprep.mubr.f32.mxu0 0.0
      %1977 = vmatmul.mubr.f32.gmra.mxu0 %v1904
      %v1978 = vpop.f32.mrf.mxu0
      %v1979 = vadd.f32 %v1901, %v1978
      %v1980 = vpop.f32.mrf.mxu0
      %1981 = vmatprep.mubr.f32.mxu0 0.0
      %1982 = vmatmul.mubr.f32.gmra.mxu0 %v1907
      %v1983 = vpop.f32.mrf.mxu0
      %v1984 = vadd.f32 %v1901, %v1983
      %v1985 = vpop.f32.mrf.mxu0
      %1986 = vmatprep.mubr.f32.mxu0 0.0
      %1987 = vmatmul.mubr.f32.gmra.mxu0 %v1910
      %v1988 = vpop.f32.mrf.mxu0
      %v1989 = vadd.f32 %v1901, %v1988
      %v1990 = vpop.f32.mrf.mxu0
      %1991 = vdwg.mxu0
      %v1992 = vld [vmem:[%s837] sm:$0x1]
      %v1994 = vlaneseq
      %v1995 = vshrl.u32 %v1994, 7
      %v1996 = vsub.s32 0, %v1995
      %v1997 = vrot.slane %v1992, %v1996
      %v1999 = vmul.f32 %v1997, %v1979
      %v2000 = vmul.f32 %v1997, %v1984
      %v2001 = vmul.f32 %v1997, %v1989
      %v2002 = vadd.f32 %v1224, %v1999
      %v2003 = vadd.f32 %v1225, %v2000
      %v2004 = vadd.f32 %v1226, %v2001
      %v2005 = vld [vmem:[%s840] sm:$0x1]
      %v2006 = vld [vmem:[%s843] sm:$0x1]
      %v2007 = vsel %vm1229, %v2002, 0.0
      %2008 = vadd.xlane.f32.xlu0 %v2007
      %v2009 = vpop.xlane.xlu0 %2008
      %v2010 = vsel %vm1229, %v2003, 0.0
      %2011 = vadd.xlane.f32.xlu0 %v2010
      %v2012 = vpop.xlane.xlu0 %2011
      %v2013 = vsel %vm1236, %v2004, 0.0
      %2014 = vadd.xlane.f32.xlu0 %v2013
      %v2015 = vpop.xlane.xlu0 %2014
      %v2016 = vmul.f32 %v2009, %v1240
      %v2017 = vmul.f32 %v2012, %v1240
      %v2018 = vmul.f32 %v2015, %v1240
      %v2019 = vsub.f32 %v2002, %v2016
      %v2020 = vsub.f32 %v2003, %v2017
      %v2021 = vsub.f32 %v2004, %v2018
      %v2022 = vmul.f32 %v2019, %v2019
      %v2023 = vmul.f32 %v2020, %v2020
      %v2024 = vmul.f32 %v2021, %v2021
      %v2025 = vsel %vm1229, %v2022, 0.0
      %2026 = vadd.xlane.f32.xlu0 %v2025
      %v2027 = vpop.xlane.xlu0 %2026
      %v2028 = vsel %vm1229, %v2023, 0.0
      %2029 = vadd.xlane.f32.xlu0 %v2028
      %v2030 = vpop.xlane.xlu0 %2029
      %v2031 = vsel %vm1236, %v2024, 0.0
      %2032 = vadd.xlane.f32.xlu0 %v2031
      %v2033 = vpop.xlane.xlu0 %2032
      %v2034 = vmul.f32 %v2027, %v1240
      %v2035 = vmul.f32 %v2030, %v1240
      %v2036 = vmul.f32 %v2033, %v1240
      %v2037 = vadd.f32 %v2034, 1e-06
      %v2038 = vadd.f32 %v2035, 1e-06
      %v2039 = vadd.f32 %v2036, 1e-06
      %v2040 = vrsqrt.pop %v2037
      %v2041 = vrsqrt.pop %v2038
      %v2042 = vrsqrt.pop %v2039
      %v2043 = vmul.f32 %v2019, %v2040
      %v2044 = vmul.f32 %v2020, %v2041
      %v2045 = vmul.f32 %v2021, %v2042
      %v2047 = vlaneseq
      %v2048 = vshrl.u32 %v2047, 7
      %v2049 = vsub.s32 0, %v2048
      %v2050 = vrot.slane %v2005, %v2049
      %v2052 = vmul.f32 %v2043, %v2050
      %v2053 = vmul.f32 %v2044, %v2050
      %v2054 = vmul.f32 %v2045, %v2050
      %v2056 = vlaneseq
      %v2057 = vshrl.u32 %v2056, 7
      %v2058 = vsub.s32 0, %v2057
      %v2059 = vrot.slane %v2006, %v2058
      %v2061 = vadd.f32 %v2052, %v2059
      %v2062 = vadd.f32 %v2053, %v2059
      %v2063 = vadd.f32 %v2054, %v2059
      %v2064 = vld [vmem:[%s848] sm:$0xff]
      %v2065 = vld [vmem:[%s848 + $0x8] sm:$0xff]
      %v2066 = vld [vmem:[%s848 + $0x10] sm:$0xff]
      %v2067 = vld [vmem:[%s848 + $0x18] sm:$0xff]
      %v2068 = vld [vmem:[%s851] sm:$0x1]
      %v2070 = vlaneseq
      %v2071 = vshrl.u32 %v2070, 7
      %v2072 = vsub.s32 0, %v2071
      %v2073 = vrot.slane %v2068, %v2072
      %v2076 = vsel %vm1229, %v2061, 0
      %v2079 = vsel %vm1229, %v2062, 0
      %v2082 = vsel %vm1229, %v2063, 0
      %2084 = vmatprep.subr.mxu0 0.0
      %2085 = vmatpush1.msra.mxu0 0.0
      %2086 = vmatprep.subr.mxu0 0.0
      %2087 = vmatpush1.msra.mxu0 0.0
      %2088 = vmatprep.subr.mxu0 0.0
      %2089 = vmatpush1.msra.mxu0 0.0
      %2090 = vmatprep.subr.mxu0 0.0
      %2091 = vmatpush1.msra.mxu0 0.0
      %2092 = vmatprep.subr.mxu0 0.0
      %2093 = vmatpush1.msra.mxu0 0.0
      %2094 = vmatprep.subr.mxu0 0.0
      %2095 = vmatpush1.msra.mxu0 0.0
      %2096 = vmatprep.subr.mxu0 0.0
      %2097 = vmatpush1.msra.mxu0 0.0
      %2098 = vmatprep.subr.mxu0 0.0
      %2099 = vmatpush1.msra.mxu0 0.0
      %2100 = vmatprep.subr.mxu0 0.0
      %2101 = vmatpush1.msra.mxu0 0.0
      %2102 = vmatprep.subr.mxu0 0.0
      %2103 = vmatpush1.msra.mxu0 0.0
      %2104 = vmatprep.subr.mxu0 0.0
      %2105 = vmatpush1.msra.mxu0 0.0
      %2106 = vmatprep.subr.mxu0 0.0
      %2107 = vmatpush1.msra.mxu0 0.0
      %2108 = vmatprep.subr.mxu0 0.0
      %2109 = vmatpush1.msra.mxu0 %v2067
      %2110 = vmatprep.subr.mxu0 0.0
      %2111 = vmatpush1.msra.mxu0 %v2066
      %2112 = vmatprep.subr.mxu0 0.0
      %2113 = vmatpush1.msra.mxu0 %v2065
      %2114 = vmatprep.subr.mxu0 0.0
      %2115 = vmatpush1.msra.mxu0 %v2064
      %2116 = vmatprep.subr.mxu0 0.0
      %2117 = vmatpush2.msra.mxu0 0.0
      %2118 = vmatprep.subr.mxu0 0.0
      %2119 = vmatpush2.msra.mxu0 0.0
      %2120 = vmatprep.subr.mxu0 0.0
      %2121 = vmatpush2.msra.mxu0 0.0
      %2122 = vmatprep.subr.mxu0 0.0
      %2123 = vmatpush2.msra.mxu0 0.0
      %2124 = vmatprep.subr.mxu0 0.0
      %2125 = vmatpush2.msra.mxu0 0.0
      %2126 = vmatprep.subr.mxu0 0.0
      %2127 = vmatpush2.msra.mxu0 0.0
      %2128 = vmatprep.subr.mxu0 0.0
      %2129 = vmatpush2.msra.mxu0 0.0
      %2130 = vmatprep.subr.mxu0 0.0
      %2131 = vmatpush2.msra.mxu0 0.0
      %2132 = vmatprep.subr.mxu0 0.0
      %2133 = vmatpush2.msra.mxu0 0.0
      %2134 = vmatprep.subr.mxu0 0.0
      %2135 = vmatpush2.msra.mxu0 0.0
      %2136 = vmatprep.subr.mxu0 0.0
      %2137 = vmatpush2.msra.mxu0 0.0
      %2138 = vmatprep.subr.mxu0 0.0
      %2139 = vmatpush2.msra.mxu0 0.0
      %2140 = vmatprep.subr.mxu0 0.0
      %2141 = vmatpush2.msra.mxu0 0.0
      %2142 = vmatprep.subr.mxu0 0.0
      %2143 = vmatpush2.msra.mxu0 0.0
      %2144 = vmatprep.subr.mxu0 0.0
      %2145 = vmatpush2.msra.mxu0 0.0
      %2146 = vmatprep.subr.mxu0 0.0
      %2147 = vmatpush2.msra.mxu0 0.0
      %2148 = vmatprep.mubr.f32.mxu0 0.0
      %2149 = vmatmul.mubr.f32.gmra.mxu0 %v2076
      %v2150 = vpop.f32.mrf.mxu0
      %v2151 = vadd.f32 %v2073, %v2150
      %v2152 = vpop.f32.mrf.mxu0
      %2153 = vmatprep.mubr.f32.mxu0 0.0
      %2154 = vmatmul.mubr.f32.gmra.mxu0 %v2079
      %v2155 = vpop.f32.mrf.mxu0
      %v2156 = vadd.f32 %v2073, %v2155
      %v2157 = vpop.f32.mrf.mxu0
      %2158 = vmatprep.mubr.f32.mxu0 0.0
      %2159 = vmatmul.mubr.f32.gmra.mxu0 %v2082
      %v2160 = vpop.f32.mrf.mxu0
      %v2161 = vadd.f32 %v2073, %v2160
      %v2162 = vpop.f32.mrf.mxu0
      %2163 = vdwg.mxu0
      %v2164 = vmul.f32 %v2151, 0.5
      %v2165 = vmul.f32 %v2156, 0.5
      %v2166 = vmul.f32 %v2161, 0.5
      %v2167 = vmul.f32 %v2151, 0.70710677
      %v2168 = vmul.f32 %v2156, 0.70710677
      %v2169 = vmul.f32 %v2161, 0.70710677
      %v2170 = verf.f32.pop %v2167
      %v2171 = verf.f32.pop %v2168
      %v2172 = verf.f32.pop %v2169
      %v2173 = vadd.f32 %v2170, 1.0
      %v2174 = vadd.f32 %v2171, 1.0
      %v2175 = vadd.f32 %v2172, 1.0
      %v2176 = vmul.f32 %v2164, %v2173
      %v2177 = vmul.f32 %v2165, %v2174
      %v2178 = vmul.f32 %v2166, %v2175
      %v2179 = vld [vmem:[%s856] sm:$0xff]
      %v2180 = vld [vmem:[%s856 + $0x8] sm:$0xff]
      %v2181 = vld [vmem:[%s856 + $0x10] sm:$0xff]
      %v2182 = vld [vmem:[%s856 + $0x18] sm:$0xff]
      %v2183 = vld [vmem:[%s856 + $0x20] sm:$0xff]
      %v2184 = vld [vmem:[%s856 + $0x28] sm:$0xff]
      %v2185 = vld [vmem:[%s856 + $0x30] sm:$0xff]
      %v2186 = vld [vmem:[%s856 + $0x38] sm:$0xff]
      %v2187 = vld [vmem:[%s856 + $0x40] sm:$0xff]
      %v2188 = vld [vmem:[%s856 + $0x48] sm:$0xff]
      %v2189 = vld [vmem:[%s856 + $0x50] sm:$0xff]
      %v2190 = vld [vmem:[%s856 + $0x58] sm:$0xff]
      %v2191 = vld [vmem:[%s856 + $0x60] sm:$0xff]
      %v2192 = vld [vmem:[%s856 + $0x68] sm:$0xff]
      %v2193 = vld [vmem:[%s856 + $0x70] sm:$0xff]
      %v2194 = vld [vmem:[%s856 + $0x78] sm:$0xff]
      %v2195 = vld [vmem:[%s859] sm:$0x1]
      %v2197 = vlaneseq
      %v2198 = vshrl.u32 %v2197, 7
      %v2199 = vsub.s32 0, %v2198
      %v2200 = vrot.slane %v2195, %v2199
      %2202 = vmatprep.subr.mxu0 0.0
      %2203 = vmatpush1.msra.mxu0 %v2194
      %2204 = vmatprep.subr.mxu0 0.0
      %2205 = vmatpush1.msra.mxu0 %v2193
      %2206 = vmatprep.subr.mxu0 0.0
      %2207 = vmatpush1.msra.mxu0 %v2192
      %2208 = vmatprep.subr.mxu0 0.0
      %2209 = vmatpush1.msra.mxu0 %v2191
      %2210 = vmatprep.subr.mxu0 0.0
      %2211 = vmatpush1.msra.mxu0 %v2190
      %2212 = vmatprep.subr.mxu0 0.0
      %2213 = vmatpush1.msra.mxu0 %v2189
      %2214 = vmatprep.subr.mxu0 0.0
      %2215 = vmatpush1.msra.mxu0 %v2188
      %2216 = vmatprep.subr.mxu0 0.0
      %2217 = vmatpush1.msra.mxu0 %v2187
      %2218 = vmatprep.subr.mxu0 0.0
      %2219 = vmatpush1.msra.mxu0 %v2186
      %2220 = vmatprep.subr.mxu0 0.0
      %2221 = vmatpush1.msra.mxu0 %v2185
      %2222 = vmatprep.subr.mxu0 0.0
      %2223 = vmatpush1.msra.mxu0 %v2184
      %2224 = vmatprep.subr.mxu0 0.0
      %2225 = vmatpush1.msra.mxu0 %v2183
      %2226 = vmatprep.subr.mxu0 0.0
      %2227 = vmatpush1.msra.mxu0 %v2182
      %2228 = vmatprep.subr.mxu0 0.0
      %2229 = vmatpush1.msra.mxu0 %v2181
      %2230 = vmatprep.subr.mxu0 0.0
      %2231 = vmatpush1.msra.mxu0 %v2180
      %2232 = vmatprep.subr.mxu0 0.0
      %2233 = vmatpush1.msra.mxu0 %v2179
      %2234 = vmatprep.subr.mxu0 0.0
      %2235 = vmatpush2.msra.mxu0 0.0
      %2236 = vmatprep.subr.mxu0 0.0
      %2237 = vmatpush2.msra.mxu0 0.0
      %2238 = vmatprep.subr.mxu0 0.0
      %2239 = vmatpush2.msra.mxu0 0.0
      %2240 = vmatprep.subr.mxu0 0.0
      %2241 = vmatpush2.msra.mxu0 0.0
      %2242 = vmatprep.subr.mxu0 0.0
      %2243 = vmatpush2.msra.mxu0 0.0
      %2244 = vmatprep.subr.mxu0 0.0
      %2245 = vmatpush2.msra.mxu0 0.0
      %2246 = vmatprep.subr.mxu0 0.0
      %2247 = vmatpush2.msra.mxu0 0.0
      %2248 = vmatprep.subr.mxu0 0.0
      %2249 = vmatpush2.msra.mxu0 0.0
      %2250 = vmatprep.subr.mxu0 0.0
      %2251 = vmatpush2.msra.mxu0 0.0
      %2252 = vmatprep.subr.mxu0 0.0
      %2253 = vmatpush2.msra.mxu0 0.0
      %2254 = vmatprep.subr.mxu0 0.0
      %2255 = vmatpush2.msra.mxu0 0.0
      %2256 = vmatprep.subr.mxu0 0.0
      %2257 = vmatpush2.msra.mxu0 0.0
      %2258 = vmatprep.subr.mxu0 0.0
      %2259 = vmatpush2.msra.mxu0 0.0
      %2260 = vmatprep.subr.mxu0 0.0
      %2261 = vmatpush2.msra.mxu0 0.0
      %2262 = vmatprep.subr.mxu0 0.0
      %2263 = vmatpush2.msra.mxu0 0.0
      %2264 = vmatprep.subr.mxu0 0.0
      %2265 = vmatpush2.msra.mxu0 0.0
      %2266 = vmatprep.mubr.f32.mxu0 0.0
      %2267 = vmatmul.mubr.f32.gmra.mxu0 %v2176
      %v2268 = vpop.f32.mrf.mxu0
      %v2269 = vadd.f32 %v2200, %v2268
      %v2270 = vpop.f32.mrf.mxu0
      %2271 = vmatprep.mubr.f32.mxu0 0.0
      %2272 = vmatmul.mubr.f32.gmra.mxu0 %v2177
      %v2273 = vpop.f32.mrf.mxu0
      %v2274 = vadd.f32 %v2200, %v2273
      %v2275 = vpop.f32.mrf.mxu0
      %2276 = vmatprep.mubr.f32.mxu0 0.0
      %2277 = vmatmul.mubr.f32.gmra.mxu0 %v2178
      %v2278 = vpop.f32.mrf.mxu0
      %v2279 = vadd.f32 %v2200, %v2278
      %v2280 = vpop.f32.mrf.mxu0
      %2281 = vdwg.mxu0
      %v2282 = vld [vmem:[%s862] sm:$0x1]
      %v2284 = vlaneseq
      %v2285 = vshrl.u32 %v2284, 7
      %v2286 = vsub.s32 0, %v2285
      %v2287 = vrot.slane %v2282, %v2286
      %v2289 = vmul.f32 %v2287, %v2269
      %v2290 = vmul.f32 %v2287, %v2274
      %v2291 = vmul.f32 %v2287, %v2279
      %v2292 = vadd.f32 %v2002, %v2289
      %v2293 = vadd.f32 %v2003, %v2290
      %v2294 = vadd.f32 %v2004, %v2291
      %2295 = vst.msk [vmem:[#allocation2] sm:$0xff] %vm1229, %v2292
      %2296 = vst.msk [vmem:[#allocation2 + $0x8] sm:$0xff] %vm1229, %v2293
      %2297 = vst.msk [vmem:[#allocation2 + $0x10] sm:$0x1] %vm1236, %v2294
      %v2298 = vld [vmem:[%s18] sm:$0x1]
      %v2299 = vld [vmem:[%s19] sm:$0x1]
      %v2300 = vsel %vm1229, %v2292, 0.0
      %2301 = vadd.xlane.f32.xlu0 %v2300
      %v2302 = vpop.xlane.xlu0 %2301
      %v2303 = vsel %vm1229, %v2293, 0.0
      %2304 = vadd.xlane.f32.xlu0 %v2303
      %v2305 = vpop.xlane.xlu0 %2304
      %v2306 = vsel %vm1236, %v2294, 0.0
      %2307 = vadd.xlane.f32.xlu0 %v2306
      %v2308 = vpop.xlane.xlu0 %2307
      %v2309 = vmul.f32 %v2302, %v1240
      %v2310 = vmul.f32 %v2305, %v1240
      %v2311 = vmul.f32 %v2308, %v1240
      %v2312 = vsub.f32 %v2292, %v2309
      %v2313 = vsub.f32 %v2293, %v2310
      %v2314 = vsub.f32 %v2294, %v2311
      %v2315 = vmul.f32 %v2312, %v2312
      %v2316 = vmul.f32 %v2313, %v2313
      %v2317 = vmul.f32 %v2314, %v2314
      %v2318 = vsel %vm1229, %v2315, 0.0
      %2319 = vadd.xlane.f32.xlu0 %v2318
      %v2320 = vpop.xlane.xlu0 %2319
      %v2321 = vsel %vm1229, %v2316, 0.0
      %2322 = vadd.xlane.f32.xlu0 %v2321
      %v2323 = vpop.xlane.xlu0 %2322
      %v2324 = vsel %vm1236, %v2317, 0.0
      %2325 = vadd.xlane.f32.xlu0 %v2324
      %v2326 = vpop.xlane.xlu0 %2325
      %v2327 = vmul.f32 %v2320, %v1240
      %v2328 = vmul.f32 %v2323, %v1240
      %v2329 = vmul.f32 %v2326, %v1240
      %v2330 = vadd.f32 %v2327, 1e-06
      %v2331 = vadd.f32 %v2328, 1e-06
      %v2332 = vadd.f32 %v2329, 1e-06
      %v2333 = vrsqrt.pop %v2330
      %v2334 = vrsqrt.pop %v2331
      %v2335 = vrsqrt.pop %v2332
      %v2336 = vmul.f32 %v2312, %v2333
      %v2337 = vmul.f32 %v2313, %v2334
      %v2338 = vmul.f32 %v2314, %v2335
      %v2340 = vlaneseq
      %v2341 = vshrl.u32 %v2340, 7
      %v2342 = vsub.s32 0, %v2341
      %v2343 = vrot.slane %v2298, %v2342
      %v2345 = vmul.f32 %v2336, %v2343
      %v2346 = vmul.f32 %v2337, %v2343
      %v2347 = vmul.f32 %v2338, %v2343
      %v2349 = vlaneseq
      %v2350 = vshrl.u32 %v2349, 7
      %v2351 = vsub.s32 0, %v2350
      %v2352 = vrot.slane %v2299, %v2351
      %v2354 = vadd.f32 %v2345, %v2352
      %v2355 = vadd.f32 %v2346, %v2352
      %v2356 = vadd.f32 %v2347, %v2352
      %vm2360 = vcmask 1046528
      %v2361 = vrot.slane %v2354, 1
      %v2362 = vrot.slane %v2355, 1
      %v2363 = vsel %vm2360, %v2361, %v2362
      %v2364 = vrot.slane %v2356, 1
      %v2365 = vsel %vm2360, %v2362, %v2364
      %2368 = vxpose.xlu0.b32.start [1/16] %v2363, 128
      %2369 = vxpose.xlu0.b32.cont [2/16] %v2365, 128
      %2370 = vxpose.xlu0.b32.cont [3/16] 0.0, 128
      %2371 = vxpose.xlu0.b32.cont [4/16] 0.0, 128
      %2372 = vxpose.xlu0.b32.cont [5/16] 0.0, 128
      %2373 = vxpose.xlu0.b32.cont [6/16] 0.0, 128
      %2374 = vxpose.xlu0.b32.cont [7/16] 0.0, 128
      %2375 = vxpose.xlu0.b32.cont [8/16] 0.0, 128
      %2376 = vxpose.xlu0.b32.cont [9/16] 0.0, 128
      %2377 = vxpose.xlu0.b32.cont [10/16] 0.0, 128
      %2378 = vxpose.xlu0.b32.cont [11/16] 0.0, 128
      %2379 = vxpose.xlu0.b32.cont [12/16] 0.0, 128
      %2380 = vxpose.xlu0.b32.cont [13/16] 0.0, 128
      %2381 = vxpose.xlu0.b32.cont [14/16] 0.0, 128
      %2382 = vxpose.xlu0.b32.cont [15/16] 0.0, 128
      %2383 = vxpose.xlu0.b32.end [16/16] 0.0, 128
      %v2384 = vpop.trf.xlu0
      %v2385 = vpop.trf.xlu0
      %v2386 = vpop.trf.xlu0
      %v2387 = vpop.trf.xlu0
      %v2388 = vpop.trf.xlu0
      %v2389 = vpop.trf.xlu0
      %v2390 = vpop.trf.xlu0
      %v2391 = vpop.trf.xlu0
      %v2392 = vpop.trf.xlu0
      %v2393 = vpop.trf.xlu0
      %v2394 = vpop.trf.xlu0
      %v2395 = vpop.trf.xlu0
      %v2396 = vpop.trf.xlu0
      %v2397 = vpop.trf.xlu0
      %v2398 = vpop.trf.xlu0
      %v2399 = vpop.trf.xlu0
      %2400 = vst.msk [vmem:[%s871] sm:$0xff] %vm1413, %v2384
      %2401 = vst.msk [vmem:[%s871 + $0x8] sm:$0xff] %vm1413, %v2385
      %2402 = vst.msk [vmem:[%s871 + $0x10] sm:$0xff] %vm1413, %v2386
      %2403 = vst.msk [vmem:[%s871 + $0x18] sm:$0xff] %vm1413, %v2387
      %p2404 = scmp.lt.s32.totalorder %s36, 3
      %s2405 = scalar_select %p2404, %s36, 3
      %p2406 = scmp.lt.s32.totalorder %s35, 1
      %s2407 = scalar_select %p2406, %s35, 1
      %s2408 = smul.addr %s2407, 4
      %s2409 = smul.addr %s2405, 8
      %s2410 = sadd.s32 %s2408, %s2409
      %s2411 = smul.addr %s2410, 8
      %s2412 = scalar_lea.vmem %s20, %s2411
      // Predicated region
      $region105: #{tpu_custom_call.1} parent=99 // pred_check
        %p2413 = pneg %p558
      $region106: #{tpu_custom_call.1} parent=99 // pred_check_branch
        %2415 = sbr.rel (%p2413) target = $region108
      $region107: #{tpu_custom_call.1} parent=99 // pred_region
        _
      $region108: #{tpu_custom_call.1} parent=99 // pred_fallthru
        _
    $region100: #{tpu_custom_call.1} parent=5 // pred_fallthru
      _
    %p2416 = scmp.le.s32.totalorder 2, %s26
    // Predicated region
    $region109: #{tpu_custom_call.1} parent=5 // pred_check
      %p2417 = pneg %p2416
    $region110: #{tpu_custom_call.1} parent=5 // pred_check_branch
      %2419 = sbr.rel (%p2417) target = $region112
    $region111: #{tpu_custom_call.1} parent=5 // pred_region
      %s2420 = ssub.s32 %s26, 2
      // Predicated region
      $region113: #{tpu_custom_call.1} parent=111 // pred_check
        %p2421 = pneg %p564
      $region114: #{tpu_custom_call.1} parent=111 // pred_check_branch
        %2423 = sbr.rel (%p2421) target = $region116
      $region115: #{tpu_custom_call.1} parent=111 // pred_region
        %p2424 = scmp.lt.s32.totalorder %s38, 3
        %s2425 = scalar_select %p2424, %s38, 3
        %p2426 = scmp.lt.s32.totalorder %s37, 1
        %s2427 = scalar_select %p2426, %s37, 1
        %s2428 = smul.addr %s2427, 4
        %s2429 = smul.addr %s2425, 8
        %s2430 = sadd.s32 %s2428, %s2429
        %s2431 = smul.addr %s2430, 8
        %s2432 = scalar_lea.vmem %s20, %s2431
      $region116: #{tpu_custom_call.1} parent=111 // pred_fallthru
        _
    $region112: #{tpu_custom_call.1} parent=5 // pred_fallthru
      _
  $region6: #{tpu_custom_call.1} parent=0 // loop_footer
    %s30 = sadd.s32 1, %s26
  $region7: #{tpu_custom_call.1} parent=0 // loop_footer_branch
    %25 = sbr.rel target = $region3
  $region8: #{tpu_custom_call.1} parent=0 // loop_exit
    _

</llo_original>
